<compile_context>
chip_gen: v7x
topology: tpu7x:2x2x1
jax: 0.10.0
libtpu: 0.0.40
codegen_flags: <defaults>
</compile_context>

<pallas_src>
import functools

import numpy as np
import jax
import jax.numpy as jnp
from jax import lax
from jax.experimental import pallas as pl
from jax.experimental.pallas import tpu as pltpu

NEG_SLOPE = 0.01          # torch.nn.LeakyReLU() default
EPS = 1e-5
NUM_GROUPS = 32


def _pick_channel_block(C, cpg, N):
    """Largest channel block <= 256 that divides C and is a multiple of the group size
    (all candidates are multiples of 8).  Shrink — but not below 64 — only when needed
    to get >= 2 parallel grid programs (megacore)."""
    cands = [c for c in (256, 128, 64, 32, 16, 8)
             if c <= C and C % c == 0 and c % cpg == 0]
    if not cands:
        return C
    for cand in cands:                       # descending: first hit is the largest valid
        if N * (C // cand) >= 2 and cand >= min(64, C):
            return cand
    return cands[0]


def _vmem_limit_bytes():
    """Generation-aware VMEM cap: ~75% of physical, at most 100 MiB."""
    try:
        cap = int(pltpu.get_tpu_info().vmem_capacity_bytes)
    except Exception:
        cap = 64 * 1024 * 1024               # conservative fallback (v7x-sized)
    return min(cap * 3 // 4, 100 * 1024 * 1024)


def _downsample_kernel(xtap_ref, w_ref, grp_ref, gamma_ref, beta_ref, out_ref,
                       *, inv_count):
    """One (sample, channel-block) per grid step.

    xtap_ref : (1, 9*C, L)  concatenated per-tap input planes (bf16 or f32)
    w_ref    : (cpb, 9*C)   conv weights for this channel block, tap-major along K
    grp_ref  : (cpb, cpb)   block-local group-indicator matrix (f32), VMEM-resident
    gamma_ref, beta_ref : (cpb, 1) f32
    out_ref  : (1, cpb, L)  lane-dense: channels on sublanes, output pixels on lanes
    """
    # 3x3 / stride-2 conv == one MXU matmul with K = 9*C (f32 accumulation).
    y = jnp.dot(w_ref[...], xtap_ref[0],
                preferred_element_type=jnp.float32)            # (cpb, L) f32

    # GroupNorm statistics: per-channel lane reduction, then group pooling.
    s = jnp.sum(y, axis=1, keepdims=True)                      # (cpb, 1)
    ss = jnp.sum(y * y, axis=1, keepdims=True)                 # (cpb, 1)
    st = jnp.concatenate([s, ss], axis=1)                      # (cpb, 2)
    stg = jnp.dot(grp_ref[...], st,
                  preferred_element_type=jnp.float32)          # (cpb, 2) group sums
    mean = stg[:, 0:1] * inv_count
    var = jnp.maximum(stg[:, 1:2] * inv_count - mean * mean, 0.0)
    inv_std = lax.rsqrt(var + EPS)

    # Folded affine + LeakyReLU (two broadcast operands, two VPU passes).
    scale = inv_std * gamma_ref[...]                           # (cpb, 1)
    shift = beta_ref[...] - mean * scale
    out = y * scale + shift
    out = jnp.where(out >= 0.0, out, NEG_SLOPE * out)
    out_ref[0] = out.astype(out_ref.dtype)


def downsample_forward(x, w, gamma, beta, *, use_bf16=True, out_dtype=jnp.float32):
    """x: (N, C, H, W) f32; w: (C, C, 3, 3) torch OIHW; gamma/beta: (C,)."""
    N, C, H, W = x.shape
    assert C % NUM_GROUPS == 0, "GroupNorm(32, C) requires C % 32 == 0"
    # PyTorch Conv2d(k=3, s=2, p=1) output size (handles odd H/W too).
    Ho = (H - 1) // 2 + 1
    Wo = (W - 1) // 2 + 1
    L = Ho * Wo
    cpg = C // NUM_GROUPS
    cpb = _pick_channel_block(C, cpg, N)
    NB = C // cpb
    cdt = jnp.bfloat16 if use_bf16 else jnp.float32

    # Reflect pad + build the concatenated per-tap RHS; no in-kernel slicing needed.
    xp = jnp.pad(x, ((0, 0), (0, 0), (1, 1), (1, 1)), mode="reflect")  # (N,C,H+2,W+2)
    taps = [xp[:, :, kh::2, kw::2][:, :, :Ho, :Wo]
            for kh in range(3) for kw in range(3)]                     # 9 x (N,C,Ho,Wo)
    xtap = jnp.stack(taps, axis=1).reshape(N, 9 * C, L).astype(cdt)   # (N, 9C, L)

    # Weights (O, I, 3, 3) -> (O, 9*I), matching the tap-major RHS layout.
    w2 = jnp.transpose(w, (0, 2, 3, 1)).reshape(C, 9 * C).astype(cdt)

    # Block-local group indicator (groups never straddle a channel block since
    # cpb % cpg == 0); constant block index -> fetched once, resident in VMEM.
    gid = np.arange(cpb) // cpg
    grp = jnp.asarray((gid[:, None] == gid[None, :]).astype(np.float32))

    gamma2 = gamma.reshape(C, 1).astype(jnp.float32)
    beta2 = beta.reshape(C, 1).astype(jnp.float32)
    inv_count = 1.0 / float(cpg * L)

    kernel = functools.partial(_downsample_kernel, inv_count=inv_count)

    ib = jnp.dtype(cdt).itemsize
    cost = pl.CostEstimate(
        flops=int(2 * N * C * 9 * C * L + 12 * N * C * L),
        transcendentals=int(N * C),
        bytes_accessed=int(N * 9 * C * L * ib + N * C * 9 * C * ib
                           + N * C * L * jnp.dtype(out_dtype).itemsize),
    )

    out = pl.pallas_call(
        kernel,
        out_shape=jax.ShapeDtypeStruct((N, C, L), out_dtype),
        grid_spec=pltpu.PrefetchScalarGridSpec(
            num_scalar_prefetch=0,
            grid=(N, NB),               # cb inner: the big xtap block stays resident
            in_specs=[
                pl.BlockSpec((1, 9 * C, L), lambda n, cb: (n, 0, 0)),
                pl.BlockSpec((cpb, 9 * C), lambda n, cb: (cb, 0)),
                pl.BlockSpec((cpb, cpb), lambda n, cb: (0, 0)),
                pl.BlockSpec((cpb, 1), lambda n, cb: (cb, 0)),
                pl.BlockSpec((cpb, 1), lambda n, cb: (cb, 0)),
            ],
            out_specs=pl.BlockSpec((1, cpb, L), lambda n, cb: (n, cb, 0)),
        ),
        compiler_params=pltpu.CompilerParams(
            dimension_semantics=("parallel", "parallel"),
            vmem_limit_bytes=_vmem_limit_bytes(),
        ),
        cost_estimate=cost,
    )(xtap, w2, grp, gamma2, beta2)

    # Already NCHW channel-major; this reshape is metadata-only (no copy, no slice).
    return out.reshape(N, C, Ho, Wo)


def _reference_forward(x, w, gamma, beta):
    """Pure-JAX reference mirroring the PyTorch module."""
    xp = jnp.pad(x, ((0, 0), (0, 0), (1, 1), (1, 1)), mode="reflect")
    y = lax.conv_general_dilated(
        xp, w, window_strides=(2, 2), padding="VALID",
        dimension_numbers=("NCHW", "OIHW", "NCHW"))
    N, C, H, W = y.shape
    yg = y.reshape(N, NUM_GROUPS, C // NUM_GROUPS, H, W)
    mean = yg.mean(axis=(2, 3, 4), keepdims=True)
    var = yg.var(axis=(2, 3, 4), keepdims=True)
    yn = ((yg - mean) / jnp.sqrt(var + EPS)).reshape(N, C, H, W)
    out = yn * gamma.reshape(1, C, 1, 1) + beta.reshape(1, C, 1, 1)
    return jnp.where(out >= 0, out, NEG_SLOPE * out)


if __name__ == "__main__":
    N, C, H, W = 2, 64, 32, 32   # C must be divisible by 32 for GroupNorm(32, C)
    key = jax.random.PRNGKey(0)
    kx, kw_, kg, kb = jax.random.split(key, 4)

    x = jax.random.normal(kx, (N, C, H, W), dtype=jnp.float32)
    w = jax.random.normal(kw_, (C, C, 3, 3), dtype=jnp.float32) * 0.05   # OIHW, bias=False
    gamma = 1.0 + 0.1 * jax.random.normal(kg, (C,), dtype=jnp.float32)   # GroupNorm weight
    beta = 0.1 * jax.random.normal(kb, (C,), dtype=jnp.float32)          # GroupNorm bias

    ref = jax.block_until_ready(_reference_forward(x, w, gamma, beta))

    # f32 operand path: tight check
    out_f32 = jax.block_until_ready(downsample_forward(x, w, gamma, beta, use_bf16=False))
    assert out_f32.shape == (N, C, H // 2, W // 2), out_f32.shape
    err32 = float(jnp.max(jnp.abs(out_f32 - ref)))
    assert err32 < 5e-4, err32

    # bf16 operand path (default / fast): check against reference on bf16-rounded inputs
    out_bf16 = jax.block_until_ready(downsample_forward(x, w, gamma, beta, use_bf16=True))
    ref_bf = _reference_forward(
        x.astype(jnp.bfloat16).astype(jnp.float32),
        w.astype(jnp.bfloat16).astype(jnp.float32), gamma, beta)
    errbf = float(jnp.max(jnp.abs(out_bf16 - ref_bf)))
    assert errbf < 5e-3, errbf
    assert float(jnp.max(jnp.abs(out_bf16 - ref))) < 1e-1   # coarse sanity vs full precision

    # Second config: C=128, N=1 -> exercises NB=2 channel blocks (cb>0 index maps)
    C2 = 128
    kx2, kw2, kg2, kb2 = jax.random.split(jax.random.PRNGKey(1), 4)
    x2 = jax.random.normal(kx2, (1, C2, 16, 16), dtype=jnp.float32)
    w2_ = jax.random.normal(kw2, (C2, C2, 3, 3), dtype=jnp.float32) * 0.05
    g2 = 1.0 + 0.1 * jax.random.normal(kg2, (C2,), dtype=jnp.float32)
    b2 = 0.1 * jax.random.normal(kb2, (C2,), dtype=jnp.float32)
    out2 = jax.block_until_ready(downsample_forward(x2, w2_, g2, b2, use_bf16=False))
    ref2 = _reference_forward(x2, w2_, g2, b2)
    assert out2.shape == (1, C2, 8, 8), out2.shape
    assert float(jnp.max(jnp.abs(out2 - ref2))) < 5e-4

    print("KERNEL_OK")
</pallas_src>

<mosaic_0001>
module attributes {stable_mosaic.version = 11 : i64} {
  func.func @_downsample_kernel(%arg0: i32, %arg1: i32, %arg2: memref<1x576x256xf32, #tpu.memory_space<vmem>>, %arg3: memref<64x576xf32, #tpu.memory_space<vmem>>, %arg4: memref<64x64xf32, #tpu.memory_space<vmem>>, %arg5: memref<64x1xf32, #tpu.memory_space<vmem>>, %arg6: memref<64x1xf32, #tpu.memory_space<vmem>>, %arg7: memref<1x64x256xf32, #tpu.memory_space<vmem>>) attributes {dimension_semantics = [#tpu.dimension_semantics<parallel>, #tpu.dimension_semantics<parallel>], iteration_bounds = array<i64: 2, 1>, scalar_prefetch = 0 : i64, scratch_operands = 0 : i64, tpu.core_type = #tpu.core_type<tc>, window_params = [{transform_indices = @transform_0, window_bounds = array<i64: 1, 576, 256>}, {transform_indices = @transform_1, window_bounds = array<i64: 64, 576>}, {pipeline_mode = #tpu.pipeline_mode<synchronous>, transform_indices = @transform_2, window_bounds = array<i64: 64, 64>}, {transform_indices = @transform_3, window_bounds = array<i64: 64, 1>}, {transform_indices = @transform_4, window_bounds = array<i64: 64, 1>}, {transform_indices = @transform_5, window_bounds = array<i64: 1, 64, 256>}]} {
    %c0 = arith.constant 0 : index
    %c0_0 = arith.constant 0 : index
    %0 = vector.load %arg3[%c0, %c0_0] : memref<64x576xf32, #tpu.memory_space<vmem>>, vector<64x576xf32>
    %c0_1 = arith.constant 0 : index
    %c0_2 = arith.constant 0 : index
    %c0_3 = arith.constant 0 : index
    %1 = vector.load %arg2[%c0_1, %c0_2, %c0_3] : memref<1x576x256xf32, #tpu.memory_space<vmem>>, vector<1x576x256xf32>
    %2 = vector.shape_cast %1 : vector<1x576x256xf32> to vector<576x256xf32>
    %cst = arith.constant dense<0.000000e+00> : vector<64x256xf32>
    %3 = tpu.matmul %0, %2, %cst {dimension_numbers = #tpu.dot_dimension_numbers<[1], [0], [0], [1], [0, 0, 1, 1], [], []>} : vector<64x576xf32>, vector<576x256xf32>, vector<64x256xf32> -> vector<64x256xf32>
    %cst_4 = arith.constant dense<0.000000e+00> : vector<64xf32>
    %4 = vector.multi_reduction <add>, %3, %cst_4 [1] : vector<64x256xf32> to vector<64xf32>
    %5 = vector.shape_cast %4 : vector<64xf32> to vector<64x1xf32>
    %6 = arith.mulf %3, %3 : vector<64x256xf32>
    %cst_5 = arith.constant dense<0.000000e+00> : vector<64xf32>
    %7 = vector.multi_reduction <add>, %6, %cst_5 [1] : vector<64x256xf32> to vector<64xf32>
    %8 = vector.shape_cast %7 : vector<64xf32> to vector<64x1xf32>
    %9 = tpu.concatenate %5, %8 in 1 : vector<64x1xf32>, vector<64x1xf32> -> vector<64x2xf32>
    %c0_6 = arith.constant 0 : index
    %c0_7 = arith.constant 0 : index
    %10 = vector.load %arg4[%c0_6, %c0_7] : memref<64x64xf32, #tpu.memory_space<vmem>>, vector<64x64xf32>
    %cst_8 = arith.constant dense<0.000000e+00> : vector<64x2xf32>
    %11 = tpu.matmul %10, %9, %cst_8 {dimension_numbers = #tpu.dot_dimension_numbers<[1], [0], [0], [1], [0, 0, 1, 1], [], []>} : vector<64x64xf32>, vector<64x2xf32>, vector<64x2xf32> -> vector<64x2xf32>
    %12 = vector.extract_strided_slice %11 {offsets = [0, 0], sizes = [64, 1], strides = [1, 1]} : vector<64x2xf32> to vector<64x1xf32>
    %cst_9 = arith.constant 0.001953125 : f32
    %13 = vector.broadcast %cst_9 : f32 to vector<64x1xf32>
    %14 = arith.mulf %12, %13 : vector<64x1xf32>
    %15 = vector.extract_strided_slice %11 {offsets = [0, 1], sizes = [64, 1], strides = [1, 1]} : vector<64x2xf32> to vector<64x1xf32>
    %cst_10 = arith.constant 0.001953125 : f32
    %16 = vector.broadcast %cst_10 : f32 to vector<64x1xf32>
    %17 = arith.mulf %15, %16 : vector<64x1xf32>
    %18 = arith.mulf %14, %14 : vector<64x1xf32>
    %19 = arith.subf %17, %18 : vector<64x1xf32>
    %cst_11 = arith.constant 0.000000e+00 : f32
    %20 = vector.broadcast %cst_11 : f32 to vector<64x1xf32>
    %21 = arith.maximumf %19, %20 : vector<64x1xf32>
    %cst_12 = arith.constant 9.99999974E-6 : f32
    %22 = vector.broadcast %cst_12 : f32 to vector<64x1xf32>
    %23 = arith.addf %21, %22 : vector<64x1xf32>
    %24 = math.rsqrt %23 : vector<64x1xf32>
    %c0_13 = arith.constant 0 : index
    %c0_14 = arith.constant 0 : index
    %25 = vector.load %arg5[%c0_13, %c0_14] : memref<64x1xf32, #tpu.memory_space<vmem>>, vector<64x1xf32>
    %26 = arith.mulf %24, %25 : vector<64x1xf32>
    %c0_15 = arith.constant 0 : index
    %c0_16 = arith.constant 0 : index
    %27 = vector.load %arg6[%c0_15, %c0_16] : memref<64x1xf32, #tpu.memory_space<vmem>>, vector<64x1xf32>
    %28 = arith.mulf %14, %26 : vector<64x1xf32>
    %29 = arith.subf %27, %28 : vector<64x1xf32>
    %30 = vector.broadcast %26 : vector<64x1xf32> to vector<64x256xf32>
    %31 = arith.mulf %3, %30 : vector<64x256xf32>
    %32 = vector.broadcast %29 : vector<64x1xf32> to vector<64x256xf32>
    %33 = arith.addf %31, %32 : vector<64x256xf32>
    %cst_17 = arith.constant 0.000000e+00 : f32
    %34 = vector.broadcast %cst_17 : f32 to vector<64x256xf32>
    %35 = arith.cmpf oge, %33, %34 : vector<64x256xf32>
    %cst_18 = arith.constant 0.00999999977 : f32
    %36 = vector.broadcast %cst_18 : f32 to vector<64x256xf32>
    %37 = arith.mulf %36, %33 : vector<64x256xf32>
    %38 = arith.select %35, %33, %37 : vector<64x256xi1>, vector<64x256xf32>
    %c0_19 = arith.constant 0 : index
    %c0_20 = arith.constant 0 : index
    %c0_21 = arith.constant 0 : index
    %39 = vector.load %arg7[%c0_19, %c0_20, %c0_21] : memref<1x64x256xf32, #tpu.memory_space<vmem>>, vector<1x64x256xf32>
    %40 = vector.shape_cast %39 : vector<1x64x256xf32> to vector<64x256xf32>
    %41 = vector.shape_cast %38 : vector<64x256xf32> to vector<1x64x256xf32>
    tpu.vector_store %arg7[%c0_19, %c0_20, %c0_21], %41 {strides = array<i32>} : memref<1x64x256xf32, #tpu.memory_space<vmem>>, vector<1x64x256xf32>,
    return
  }
  func.func @transform_0(%arg0: i32, %arg1: i32) -> (i32, i32, i32) {
    %c0_i32 = arith.constant 0 : i32
    %c0_i32_0 = arith.constant 0 : i32
    %c0_i32_1 = arith.constant 0 : i32
    return %arg0, %c0_i32, %c0_i32_0 : i32, i32, i32
  }
  func.func @transform_1(%arg0: i32, %arg1: i32) -> (i32, i32) {
    %c0_i32 = arith.constant 0 : i32
    %c0_i32_0 = arith.constant 0 : i32
    return %arg1, %c0_i32 : i32, i32
  }
  func.func @transform_2(%arg0: i32, %arg1: i32) -> (i32, i32) {
    %c0_i32 = arith.constant 0 : i32
    %c0_i32_0 = arith.constant 0 : i32
    %c0_i32_1 = arith.constant 0 : i32
    return %c0_i32, %c0_i32_0 : i32, i32
  }
  func.func @transform_3(%arg0: i32, %arg1: i32) -> (i32, i32) {
    %c0_i32 = arith.constant 0 : i32
    %c0_i32_0 = arith.constant 0 : i32
    return %arg1, %c0_i32 : i32, i32
  }
  func.func @transform_4(%arg0: i32, %arg1: i32) -> (i32, i32) {
    %c0_i32 = arith.constant 0 : i32
    %c0_i32_0 = arith.constant 0 : i32
    return %arg1, %c0_i32 : i32, i32
  }
  func.func @transform_5(%arg0: i32, %arg1: i32) -> (i32, i32, i32) {
    %c0_i32 = arith.constant 0 : i32
    %c0_i32_0 = arith.constant 0 : i32
    return %arg0, %arg1, %c0_i32 : i32, i32, i32
  }
}

</mosaic_0001>

<llo_original>
// kernel: tpu_custom_call.1
$region0: #{tpu_custom_call.1}
  #allocation0 [shape = 'u32[]', space=smem, size = 0x4, offset = 0x4, fixed_abs, tag = 'smem constant byte address 0x4 - core index']
  #allocation1 [shape = 'u32[144,128]{1,0:T(1,128)}', space=vmem, size = 0x12000, scoped, tag = 'internal scratch']
  %s0 = inlined_call_operand.hbm [shape: f32[2,576,256], index: 0, kind: input, shape index: {}]
  %s1 = inlined_call_operand.hbm [shape: f32[64,576], index: 1, kind: input, shape index: {}]
  %s2 = inlined_call_operand.hbm [shape: f32[64,64], index: 2, kind: input, shape index: {}]
  %s3 = inlined_call_operand.vmem [shape: f32[64,1], index: 3, kind: input, shape index: {}]
  %s4 = inlined_call_operand.vmem [shape: f32[64,1], index: 4, kind: input, shape index: {}]
  %s5 = inlined_call_operand.hbm [shape: f32[2,64,256], index: 5, kind: output, shape index: {}]
  %s6 = sld [smem:[#allocation0]]
  $region65: #{tpu_custom_call.1} parent=0
    _
  %s8 = ssub.s32 1, %s6
  %s9 = scalar_select 0, %s8, %s6
  $region1: #{tpu_custom_call.1} parent=0
    #allocation2 [shape = 'u8[1179648]{0}', space=vmem, size = 0x120000, scoped, tag = 'input window, operand 0']
    #allocation3 [shape = 's32[2]{0}', space=sflag, size = 0x8, scoped, tag = 'scoped memory for tpu_custom_call.1']
    #allocation4 [shape = 's32[2]{0}', space=sflag, size = 0x8, scoped, tag = 'scoped memory for tpu_custom_call.1']
    #allocation5 [shape = 'u8[163840]{0}', space=vmem, size = 0x28000, scoped, tag = 'input window, operand 1, single buffered']
    #allocation6 [shape = 's32[1]{0}', space=sflag, size = 0x4, scoped, tag = 'scoped memory for tpu_custom_call.1']
    #allocation7 [shape = 'u8[32768]{0}', space=vmem, size = 0x8000, scoped, tag = 'input window, operand 2, single buffered']
    #allocation8 [shape = 'u8[131072]{0}', space=vmem, size = 0x20000, scoped, tag = 'output window, operand 0']
    %10 = vsyncpa [#allocation3], 0
    %s11 = scalar_lea.sflag [#allocation3], 1
    %12 = vsyncpa %s11, 0
    %13 = vsyncpa [#allocation6], 0
    %14 = vsyncpa [#allocation4], 0
    %s15 = scalar_lea.sflag [#allocation4], 1
    %16 = vsyncpa %s15, 0
    loop: start=0, step=1, limit=4
    $region2: #{tpu_custom_call.1} parent=1 // loop_pre_header
      _
    $region3: #{tpu_custom_call.1} parent=1 // loop_header
      %s18 = sphi 0, %s22
      %p19 = scmp.ge.s32.totalorder %s18, 4
      %s25 = sphi 0, %s37
      %s26 = sphi 0, %s33
      %s27 = sphi 0, %s25
      %s28 = sphi 0, %s26
      %s29 = sphi 0, %s27
      %s30 = sphi 0, %s28
      %s40 = sphi 0, %s42
      %s43 = sphi 0, %s40
      %s44 = sphi 0, %s43
      %s60 = sphi 0, %s44
      %s66 = sphi 0, %s68
      %s69 = sphi 0, %s66
      %s70 = sphi 0, %s69
      %s86 = sphi 0, %s70
      %s90 = sphi 0, %s90
      %s92 = sphi 0, %s90
      %s93 = sphi 0, %s92
      %s107 = sphi 0, %s93
      %s113 = sphi 0, %s115
      %s116 = sphi 0, %s113
      %s117 = sphi 0, %s116
      %s133 = sphi 0, %s117
      %s139 = sphi 0, %s141
      %s142 = sphi 0, %s139
      %s143 = sphi 0, %s142
      %s159 = sphi 0, %s143
      %s167 = sphi 0, %s169
      %s170 = sphi 0, %s167
      %s171 = sphi 0, %s170
      %s187 = sphi 0, %s171
    $region4: #{tpu_custom_call.1} parent=1 // loop_header_branch
      %21 = sbr.rel (%p19) target = $region8
    $region5: #{tpu_custom_call.1} parent=1 // loop_body
      %s23 = ssub.s32 %s18, 1
      %s24 = ssub.s32 %s18, 2
      %s31 = sadd.s32 1, %s26
      %p32 = scmp.ge.s32.totalorder %s31, 1
      %s33 = scalar_select %p32, 0, %s31
      %s34 = sadd.s32 1, %s25
      %s35 = scalar_select %p32, %s34, %s25
      %p36 = scmp.ge.s32.totalorder %s35, 2
      %s37 = scalar_select %p36, 0, %s35
      %s38 = ssub.s32 %s25, %s37
      %p39 = scmp.eq.s32.totalorder %s38, 0
      %s41 = sadd.s32 %s40, 1
      %s42 = scalar_select %p39, %s40, %s41
      %p45 = pneg %p39
      %p46 = scmp.eq.s32.totalorder %s18, 1
      %p47 = por %p45, %p46
      %p48 = scmp.ne.s32.totalorder %s40, %s43
      %p49 = scmp.eq.s32.totalorder %s18, 0
      %p50 = por %p48, %p49
      %p51 = scmp.ne.s32.totalorder %s40, %s43
      %p52 = scmp.eq.s32.totalorder %s23, 1
      %p53 = por %p51, %p52
      %p54 = scmp.ne.s32.totalorder %s43, %s44
      %p55 = scmp.eq.s32.totalorder %s23, 0
      %p56 = por %p54, %p55
      %p57 = scmp.ne.s32.totalorder %s43, %s44
      %p58 = scmp.eq.s32.totalorder %s24, 1
      %p59 = por %p57, %p58
      %p61 = scmp.ne.s32.totalorder %s44, %s60
      %p62 = scmp.eq.s32.totalorder %s24, 0
      %p63 = por %p61, %p62
      %s64 = ssub.s32 %s26, %s33
      %p65 = scmp.eq.s32.totalorder %s64, 0
      %s67 = sadd.s32 %s66, 1
      %s68 = scalar_select %p65, %s66, %s67
      %p71 = pneg %p65
      %p72 = scmp.eq.s32.totalorder %s18, 1
      %p73 = por %p71, %p72
      %p74 = scmp.ne.s32.totalorder %s66, %s69
      %p75 = scmp.eq.s32.totalorder %s18, 0
      %p76 = por %p74, %p75
      %p77 = scmp.ne.s32.totalorder %s66, %s69
      %p78 = scmp.eq.s32.totalorder %s23, 1
      %p79 = por %p77, %p78
      %p80 = scmp.ne.s32.totalorder %s69, %s70
      %p81 = scmp.eq.s32.totalorder %s23, 0
      %p82 = por %p80, %p81
      %p83 = scmp.ne.s32.totalorder %s69, %s70
      %p84 = scmp.eq.s32.totalorder %s24, 1
      %p85 = por %p83, %p84
      %p87 = scmp.ne.s32.totalorder %s70, %s86
      %p88 = scmp.eq.s32.totalorder %s24, 0
      %p89 = por %p87, %p88
      %s91 = sadd.s32 %s90, 1
      %p94 = scmp.eq.s32.totalorder %s18, 1
      %p95 = scmp.ne.s32.totalorder %s90, %s92
      %p96 = scmp.eq.s32.totalorder %s18, 0
      %p97 = por %p95, %p96
      %p98 = scmp.ne.s32.totalorder %s90, %s92
      %p99 = scmp.eq.s32.totalorder %s23, 1
      %p100 = por %p98, %p99
      %p101 = scmp.ne.s32.totalorder %s92, %s93
      %p102 = scmp.eq.s32.totalorder %s23, 0
      %p103 = por %p101, %p102
      %p104 = scmp.ne.s32.totalorder %s92, %s93
      %p105 = scmp.eq.s32.totalorder %s24, 1
      %p106 = por %p104, %p105
      %p108 = scmp.ne.s32.totalorder %s93, %s107
      %p109 = scmp.eq.s32.totalorder %s24, 0
      %p110 = por %p108, %p109
      %s111 = ssub.s32 %s26, %s33
      %p112 = scmp.eq.s32.totalorder %s111, 0
      %s114 = sadd.s32 %s113, 1
      %s115 = scalar_select %p112, %s113, %s114
      %p118 = pneg %p112
      %p119 = scmp.eq.s32.totalorder %s18, 1
      %p120 = por %p118, %p119
      %p121 = scmp.ne.s32.totalorder %s113, %s116
      %p122 = scmp.eq.s32.totalorder %s18, 0
      %p123 = por %p121, %p122
      %p124 = scmp.ne.s32.totalorder %s113, %s116
      %p125 = scmp.eq.s32.totalorder %s23, 1
      %p126 = por %p124, %p125
      %p127 = scmp.ne.s32.totalorder %s116, %s117
      %p128 = scmp.eq.s32.totalorder %s23, 0
      %p129 = por %p127, %p128
      %p130 = scmp.ne.s32.totalorder %s116, %s117
      %p131 = scmp.eq.s32.totalorder %s24, 1
      %p132 = por %p130, %p131
      %p134 = scmp.ne.s32.totalorder %s117, %s133
      %p135 = scmp.eq.s32.totalorder %s24, 0
      %p136 = por %p134, %p135
      %s137 = ssub.s32 %s26, %s33
      %p138 = scmp.eq.s32.totalorder %s137, 0
      %s140 = sadd.s32 %s139, 1
      %s141 = scalar_select %p138, %s139, %s140
      %p144 = pneg %p138
      %p145 = scmp.eq.s32.totalorder %s18, 1
      %p146 = por %p144, %p145
      %p147 = scmp.ne.s32.totalorder %s139, %s142
      %p148 = scmp.eq.s32.totalorder %s18, 0
      %p149 = por %p147, %p148
      %p150 = scmp.ne.s32.totalorder %s139, %s142
      %p151 = scmp.eq.s32.totalorder %s23, 1
      %p152 = por %p150, %p151
      %p153 = scmp.ne.s32.totalorder %s142, %s143
      %p154 = scmp.eq.s32.totalorder %s23, 0
      %p155 = por %p153, %p154
      %p156 = scmp.ne.s32.totalorder %s142, %s143
      %p157 = scmp.eq.s32.totalorder %s24, 1
      %p158 = por %p156, %p157
      %p160 = scmp.ne.s32.totalorder %s143, %s159
      %p161 = scmp.eq.s32.totalorder %s24, 0
      %p162 = por %p160, %p161
      %s163 = ssub.s32 %s25, %s37
      %s164 = ssub.s32 %s26, %s33
      %s165 = sor.u32 %s163, %s164
      %p166 = scmp.eq.s32.totalorder %s165, 0
      %s168 = sadd.s32 %s167, 1
      %s169 = scalar_select %p166, %s167, %s168
      %p172 = pneg %p166
      %p173 = scmp.eq.s32.totalorder %s18, 1
      %p174 = por %p172, %p173
      %p175 = scmp.ne.s32.totalorder %s167, %s170
      %p176 = scmp.eq.s32.totalorder %s18, 0
      %p177 = por %p175, %p176
      %p178 = scmp.ne.s32.totalorder %s167, %s170
      %p179 = scmp.eq.s32.totalorder %s23, 1
      %p180 = por %p178, %p179
      %p181 = scmp.ne.s32.totalorder %s170, %s171
      %p182 = scmp.eq.s32.totalorder %s23, 0
      %p183 = por %p181, %p182
      %p184 = scmp.ne.s32.totalorder %s170, %s171
      %p185 = scmp.eq.s32.totalorder %s24, 1
      %p186 = por %p184, %p185
      %p188 = scmp.ne.s32.totalorder %s171, %s187
      %p189 = scmp.eq.s32.totalorder %s24, 0
      %p190 = por %p188, %p189
      %p191 = scmp.le.s32.totalorder 1, %s18
      %p192 = scmp.lt.s32.totalorder %s18, 3
      %p193 = pnand %p191, %p192
      %p194 = pneg %p193
      // Predicated region
      $region9: #{tpu_custom_call.1} parent=5 // pred_check
        _
      $region10: #{tpu_custom_call.1} parent=5 // pred_check_branch
        %196 = sbr.rel (%p193) target = $region12
      $region11: #{tpu_custom_call.1} parent=5 // pred_region
        %s197 = ssub.s32 %s18, 1
        // Predicated region
        $region13: #{tpu_custom_call.1} parent=11 // pred_check
          %p198 = pneg %p82
        $region14: #{tpu_custom_call.1} parent=11 // pred_check_branch
          %200 = sbr.rel (%p198) target = $region16
        $region15: #{tpu_custom_call.1} parent=11 // pred_region
          %s201 = smul.u32 8, %s28
          %s203 = ssub.s32 5120, 5120
          %204 = vsyncadd [#allocation6], %s203
          %s205 = smul.addr %s201, 5
          %s206 = smul.addr %s205, 128
          %s207 = scalar_lea.hbm %s1, %s206
          %s208 = sshll.u32 [#allocation5], 4
          %s209 = int_to_ptr.vmem [resolvable:$true] %s208
          %214 = dma.hbm_to_vmem [thread:$0]  %s207, 5120, %s209, [#allocation6], 640, 640, 40
        $region16: #{tpu_custom_call.1} parent=11 // pred_fallthru
          _
        // Predicated region
        $region17: #{tpu_custom_call.1} parent=11 // pred_check
          %p215 = pneg %p103
        $region18: #{tpu_custom_call.1} parent=11 // pred_check_branch
          %217 = sbr.rel (%p215) target = $region20
        $region19: #{tpu_custom_call.1} parent=11 // pred_region
          %s219 = ssub.s32 1024, 1024
          %220 = vsyncadd [#allocation6], %s219
          %s221 = sshll.u32 [#allocation7], 4
          %s222 = int_to_ptr.vmem [resolvable:$true] %s221
          %227 = dma.hbm_to_vmem [thread:$0]  %s2, 1024, %s222, [#allocation6], 128, 128, 8
        $region20: #{tpu_custom_call.1} parent=11 // pred_fallthru
          _
        // Predicated region
        $region21: #{tpu_custom_call.1} parent=11 // pred_check
          %p228 = pneg %p129
        $region22: #{tpu_custom_call.1} parent=11 // pred_check_branch
          %230 = sbr.rel (%p228) target = $region24
        $region23: #{tpu_custom_call.1} parent=11 // pred_region
          %s231 = smul.u32 8, %s28
          %p232 = scmp.lt.s32.totalorder %s231, 7
          %s233 = scalar_select %p232, %s231, 7
          %s234 = smul.addr %s233, 8
          %s235 = scalar_lea.vmem %s3, %s234
          %s236 = smul.u32 8, %s28
        $region24: #{tpu_custom_call.1} parent=11 // pred_fallthru
          _
        // Predicated region
        $region25: #{tpu_custom_call.1} parent=11 // pred_check
          %p237 = pneg %p155
        $region26: #{tpu_custom_call.1} parent=11 // pred_check_branch
          %239 = sbr.rel (%p237) target = $region28
        $region27: #{tpu_custom_call.1} parent=11 // pred_region
          %s240 = smul.u32 8, %s28
          %p241 = scmp.lt.s32.totalorder %s240, 7
          %s242 = scalar_select %p241, %s240, 7
          %s243 = smul.addr %s242, 8
          %s244 = scalar_lea.vmem %s4, %s243
          %s245 = smul.u32 8, %s28
        $region28: #{tpu_custom_call.1} parent=11 // pred_fallthru
          _
      $region12: #{tpu_custom_call.1} parent=5 // pred_fallthru
        _
      %p246 = scmp.lt.s32.totalorder %s18, 2
      // Predicated region
      $region29: #{tpu_custom_call.1} parent=5 // pred_check
        %p247 = pneg %p246
      $region30: #{tpu_custom_call.1} parent=5 // pred_check_branch
        %249 = sbr.rel (%p247) target = $region32
      $region31: #{tpu_custom_call.1} parent=5 // pred_region
        // Predicated region
        $region33: #{tpu_custom_call.1} parent=31 // pred_check
          %p250 = pneg %p50
        $region34: #{tpu_custom_call.1} parent=31 // pred_check_branch
          %252 = sbr.rel (%p250) target = $region36
        $region35: #{tpu_custom_call.1} parent=31 // pred_region
          %s253 = sand.u32 %s40, 1
          %s254 = scalar_lea.sflag [#allocation3], %s253
          %s255 = sand.u32 %s40, 1
          %s256 = smul.addr %s255, 1152
          %s257 = scalar_lea.vmem [#allocation2], %s256
          %s259 = ssub.s32 18432, 18432
          %260 = vsyncadd %s254, %s259
          %s261 = smul.addr %s25, 144
          %s262 = smul.addr %s261, 128
          %s263 = scalar_lea.hbm %s0, %s262
          %s264 = sshll.u32 %s257, 4
          %s265 = int_to_ptr.vmem [resolvable:$true] %s264
          %270 = dma.hbm_to_vmem [thread:$0]  %s263, 18432, %s265, %s254, 256, 256, 16
        $region36: #{tpu_custom_call.1} parent=31 // pred_fallthru
          _
      $region32: #{tpu_custom_call.1} parent=5 // pred_fallthru
        _
      %p271 = scmp.le.s32.totalorder 1, %s18
      %p272 = scmp.lt.s32.totalorder %s18, 3
      %p273 = pnand %p271, %p272
      %p274 = pneg %p273
      // Predicated region
      $region37: #{tpu_custom_call.1} parent=5 // pred_check
        _
      $region38: #{tpu_custom_call.1} parent=5 // pred_check_branch
        %276 = sbr.rel (%p273) target = $region40
      $region39: #{tpu_custom_call.1} parent=5 // pred_region
        %s277 = ssub.s32 %s18, 1
        %s278 = sand.u32 %s43, 1
        %s279 = scalar_lea.sflag [#allocation3], %s278
        %s280 = sand.u32 %s43, 1
        %s281 = smul.addr %s280, 1152
        %s282 = scalar_lea.vmem [#allocation2], %s281
        // Predicated region
        $region41: #{tpu_custom_call.1} parent=39 // pred_check
          %p283 = pneg %p56
        $region42: #{tpu_custom_call.1} parent=39 // pred_check_branch
          %285 = sbr.rel (%p283) target = $region44
        $region43: #{tpu_custom_call.1} parent=39 // pred_region
          %286 = dma.done %s279, 18432
        $region44: #{tpu_custom_call.1} parent=39 // pred_fallthru
          _
        // Predicated region
        $region45: #{tpu_custom_call.1} parent=39 // pred_check
          %p287 = pneg %p82
        $region46: #{tpu_custom_call.1} parent=39 // pred_check_branch
          %289 = sbr.rel (%p287) target = $region48
        $region47: #{tpu_custom_call.1} parent=39 // pred_region
          %290 = dma.done [#allocation6], 5120
        $region48: #{tpu_custom_call.1} parent=39 // pred_fallthru
          _
        // Predicated region
        $region49: #{tpu_custom_call.1} parent=39 // pred_check
          %p291 = pneg %p103
        $region50: #{tpu_custom_call.1} parent=39 // pred_check_branch
          %293 = sbr.rel (%p291) target = $region52
        $region51: #{tpu_custom_call.1} parent=39 // pred_region
          %294 = dma.done [#allocation6], 1024
        $region52: #{tpu_custom_call.1} parent=39 // pred_fallthru
          _
        %s295 = sand.u32 %s43, 1
        %s296 = scalar_lea.sflag [#allocation3], %s295
        %s297 = sand.u32 %s43, 1
        %s298 = smul.addr %s297, 1152
        %s299 = scalar_lea.vmem [#allocation2], %s298
        %p300 = pneg %p56
        %p301 = pneg %p53
        %p302 = pneg %p82
        %p303 = pneg %p79
        %p304 = pneg %p103
        %p305 = pneg %p100
        %s306 = smul.u32 8, %s28
        %p307 = scmp.lt.s32.totalorder %s306, 7
        %s308 = scalar_select %p307, %s306, 7
        %s309 = smul.addr %s308, 8
        %s310 = scalar_lea.vmem %s3, %s309
        %p311 = pneg %p129
        %p312 = pneg %p126
        %s313 = smul.u32 8, %s28
        %p314 = scmp.lt.s32.totalorder %s313, 7
        %s315 = scalar_select %p314, %s313, 7
        %s316 = smul.addr %s315, 8
        %s317 = scalar_lea.vmem %s4, %s316
        %p318 = pneg %p155
        %p319 = pneg %p152
        %p320 = pneg %p183
        %p321 = pneg %p180
        %s322 = sand.u32 %s170, 1
        %s323 = scalar_lea.sflag [#allocation4], %s322
        %s324 = sand.u32 %s170, 1
        %s325 = smul.addr %s324, 128
        %s326 = scalar_lea.vmem [#allocation8], %s325
        %s327 = smul.u32 8, %s28
        %s328 = smul.u32 8, %s28
        %p329 = scmp.lt.s32.totalorder %s328, 7
        %s330 = scalar_select %p329, %s328, 7
        %s331 = smul.addr %s330, 8
        %s332 = scalar_lea.vmem %s3, %s331
        %s333 = smul.u32 8, %s28
        %s334 = smul.u32 8, %s28
        %p335 = scmp.lt.s32.totalorder %s334, 7
        %s336 = scalar_select %p335, %s334, 7
        %s337 = smul.addr %s336, 8
        %s338 = scalar_lea.vmem %s4, %s337
        %s339 = smul.u32 8, %s28
        %s340 = smul.u32 8, %s28
        %v341 = vld [vmem:[#allocation5] sm:$0xff]
        %v342 = vld [vmem:[#allocation5 + $0x8] sm:$0xff]
        %v343 = vld [vmem:[#allocation5 + $0x10] sm:$0xff]
        %v344 = vld [vmem:[#allocation5 + $0x18] sm:$0xff]
        %v345 = vld [vmem:[#allocation5 + $0x20] sm:$0xff]
        %v346 = vld [vmem:[#allocation5 + $0x28] sm:$0xff]
        %v347 = vld [vmem:[#allocation5 + $0x30] sm:$0xff]
        %v348 = vld [vmem:[#allocation5 + $0x38] sm:$0xff]
        %v349 = vld [vmem:[#allocation5 + $0x40] sm:$0xff]
        %v350 = vld [vmem:[#allocation5 + $0x48] sm:$0xff]
        %v351 = vld [vmem:[#allocation5 + $0x50] sm:$0xff]
        %v352 = vld [vmem:[#allocation5 + $0x58] sm:$0xff]
        %v353 = vld [vmem:[#allocation5 + $0x60] sm:$0xff]
        %v354 = vld [vmem:[#allocation5 + $0x68] sm:$0xff]
        %v355 = vld [vmem:[#allocation5 + $0x70] sm:$0xff]
        %v356 = vld [vmem:[#allocation5 + $0x78] sm:$0xff]
        %v357 = vld [vmem:[#allocation5 + $0x80] sm:$0xff]
        %v358 = vld [vmem:[#allocation5 + $0x88] sm:$0xff]
        %v359 = vld [vmem:[#allocation5 + $0x90] sm:$0xff]
        %v360 = vld [vmem:[#allocation5 + $0x98] sm:$0xff]
        %v361 = vld [vmem:[#allocation5 + $0xa0] sm:$0xff]
        %v362 = vld [vmem:[#allocation5 + $0xa8] sm:$0xff]
        %v363 = vld [vmem:[#allocation5 + $0xb0] sm:$0xff]
        %v364 = vld [vmem:[#allocation5 + $0xb8] sm:$0xff]
        %v365 = vld [vmem:[#allocation5 + $0xc0] sm:$0xff]
        %v366 = vld [vmem:[#allocation5 + $0xc8] sm:$0xff]
        %v367 = vld [vmem:[#allocation5 + $0xd0] sm:$0xff]
        %v368 = vld [vmem:[#allocation5 + $0xd8] sm:$0xff]
        %v369 = vld [vmem:[#allocation5 + $0xe0] sm:$0xff]
        %v370 = vld [vmem:[#allocation5 + $0xe8] sm:$0xff]
        %v371 = vld [vmem:[#allocation5 + $0xf0] sm:$0xff]
        %v372 = vld [vmem:[#allocation5 + $0xf8] sm:$0xff]
        %v373 = vld [vmem:[#allocation5 + $0x100] sm:$0xff]
        %v374 = vld [vmem:[#allocation5 + $0x108] sm:$0xff]
        %v375 = vld [vmem:[#allocation5 + $0x110] sm:$0xff]
        %v376 = vld [vmem:[#allocation5 + $0x118] sm:$0xff]
        %v377 = vld [vmem:[#allocation5 + $0x120] sm:$0xff]
        %v378 = vld [vmem:[#allocation5 + $0x128] sm:$0xff]
        %v379 = vld [vmem:[#allocation5 + $0x130] sm:$0xff]
        %v380 = vld [vmem:[#allocation5 + $0x138] sm:$0xff]
        %v381 = vld [vmem:[%s282] sm:$0xff]
        %v382 = vld [vmem:[%s282 + $0x8] sm:$0xff]
        %v383 = vld [vmem:[%s282 + $0x10] sm:$0xff]
        %v384 = vld [vmem:[%s282 + $0x18] sm:$0xff]
        %v385 = vld [vmem:[%s282 + $0x20] sm:$0xff]
        %v386 = vld [vmem:[%s282 + $0x28] sm:$0xff]
        %v387 = vld [vmem:[%s282 + $0x30] sm:$0xff]
        %v388 = vld [vmem:[%s282 + $0x38] sm:$0xff]
        %v389 = vld [vmem:[%s282 + $0x40] sm:$0xff]
        %v390 = vld [vmem:[%s282 + $0x48] sm:$0xff]
        %v391 = vld [vmem:[%s282 + $0x50] sm:$0xff]
        %v392 = vld [vmem:[%s282 + $0x58] sm:$0xff]
        %v393 = vld [vmem:[%s282 + $0x60] sm:$0xff]
        %v394 = vld [vmem:[%s282 + $0x68] sm:$0xff]
        %v395 = vld [vmem:[%s282 + $0x70] sm:$0xff]
        %v396 = vld [vmem:[%s282 + $0x78] sm:$0xff]
        %v397 = vld [vmem:[%s282 + $0x80] sm:$0xff]
        %v398 = vld [vmem:[%s282 + $0x88] sm:$0xff]
        %v399 = vld [vmem:[%s282 + $0x90] sm:$0xff]
        %v400 = vld [vmem:[%s282 + $0x98] sm:$0xff]
        %v401 = vld [vmem:[%s282 + $0xa0] sm:$0xff]
        %v402 = vld [vmem:[%s282 + $0xa8] sm:$0xff]
        %v403 = vld [vmem:[%s282 + $0xb0] sm:$0xff]
        %v404 = vld [vmem:[%s282 + $0xb8] sm:$0xff]
        %v405 = vld [vmem:[%s282 + $0xc0] sm:$0xff]
        %v406 = vld [vmem:[%s282 + $0xc8] sm:$0xff]
        %v407 = vld [vmem:[%s282 + $0xd0] sm:$0xff]
        %v408 = vld [vmem:[%s282 + $0xd8] sm:$0xff]
        %v409 = vld [vmem:[%s282 + $0xe0] sm:$0xff]
        %v410 = vld [vmem:[%s282 + $0xe8] sm:$0xff]
        %v411 = vld [vmem:[%s282 + $0xf0] sm:$0xff]
        %v412 = vld [vmem:[%s282 + $0xf8] sm:$0xff]
        %v413 = vld [vmem:[%s282 + $0x100] sm:$0xff]
        %v414 = vld [vmem:[%s282 + $0x108] sm:$0xff]
        %v415 = vld [vmem:[%s282 + $0x110] sm:$0xff]
        %v416 = vld [vmem:[%s282 + $0x118] sm:$0xff]
        %v417 = vld [vmem:[%s282 + $0x120] sm:$0xff]
        %v418 = vld [vmem:[%s282 + $0x128] sm:$0xff]
        %v419 = vld [vmem:[%s282 + $0x130] sm:$0xff]
        %v420 = vld [vmem:[%s282 + $0x138] sm:$0xff]
        %v421 = vld [vmem:[%s282 + $0x140] sm:$0xff]
        %v422 = vld [vmem:[%s282 + $0x148] sm:$0xff]
        %v423 = vld [vmem:[%s282 + $0x150] sm:$0xff]
        %v424 = vld [vmem:[%s282 + $0x158] sm:$0xff]
        %v425 = vld [vmem:[%s282 + $0x160] sm:$0xff]
        %v426 = vld [vmem:[%s282 + $0x168] sm:$0xff]
        %v427 = vld [vmem:[%s282 + $0x170] sm:$0xff]
        %v428 = vld [vmem:[%s282 + $0x178] sm:$0xff]
        %v429 = vld [vmem:[%s282 + $0x180] sm:$0xff]
        %v430 = vld [vmem:[%s282 + $0x188] sm:$0xff]
        %v431 = vld [vmem:[%s282 + $0x190] sm:$0xff]
        %v432 = vld [vmem:[%s282 + $0x198] sm:$0xff]
        %v433 = vld [vmem:[%s282 + $0x1a0] sm:$0xff]
        %v434 = vld [vmem:[%s282 + $0x1a8] sm:$0xff]
        %v435 = vld [vmem:[%s282 + $0x1b0] sm:$0xff]
        %v436 = vld [vmem:[%s282 + $0x1b8] sm:$0xff]
        %v437 = vld [vmem:[%s282 + $0x1c0] sm:$0xff]
        %v438 = vld [vmem:[%s282 + $0x1c8] sm:$0xff]
        %v439 = vld [vmem:[%s282 + $0x1d0] sm:$0xff]
        %v440 = vld [vmem:[%s282 + $0x1d8] sm:$0xff]
        %v441 = vld [vmem:[%s282 + $0x1e0] sm:$0xff]
        %v442 = vld [vmem:[%s282 + $0x1e8] sm:$0xff]
        %v443 = vld [vmem:[%s282 + $0x1f0] sm:$0xff]
        %v444 = vld [vmem:[%s282 + $0x1f8] sm:$0xff]
        %v445 = vld [vmem:[%s282 + $0x200] sm:$0xff]
        %v446 = vld [vmem:[%s282 + $0x208] sm:$0xff]
        %v447 = vld [vmem:[%s282 + $0x210] sm:$0xff]
        %v448 = vld [vmem:[%s282 + $0x218] sm:$0xff]
        %v449 = vld [vmem:[%s282 + $0x220] sm:$0xff]
        %v450 = vld [vmem:[%s282 + $0x228] sm:$0xff]
        %v451 = vld [vmem:[%s282 + $0x230] sm:$0xff]
        %v452 = vld [vmem:[%s282 + $0x238] sm:$0xff]
        %v453 = vld [vmem:[%s282 + $0x240] sm:$0xff]
        %v454 = vld [vmem:[%s282 + $0x248] sm:$0xff]
        %v455 = vld [vmem:[%s282 + $0x250] sm:$0xff]
        %v456 = vld [vmem:[%s282 + $0x258] sm:$0xff]
        %v457 = vld [vmem:[%s282 + $0x260] sm:$0xff]
        %v458 = vld [vmem:[%s282 + $0x268] sm:$0xff]
        %v459 = vld [vmem:[%s282 + $0x270] sm:$0xff]
        %v460 = vld [vmem:[%s282 + $0x278] sm:$0xff]
        %v461 = vld [vmem:[%s282 + $0x280] sm:$0xff]
        %v462 = vld [vmem:[%s282 + $0x288] sm:$0xff]
        %v463 = vld [vmem:[%s282 + $0x290] sm:$0xff]
        %v464 = vld [vmem:[%s282 + $0x298] sm:$0xff]
        %v465 = vld [vmem:[%s282 + $0x2a0] sm:$0xff]
        %v466 = vld [vmem:[%s282 + $0x2a8] sm:$0xff]
        %v467 = vld [vmem:[%s282 + $0x2b0] sm:$0xff]
        %v468 = vld [vmem:[%s282 + $0x2b8] sm:$0xff]
        %v469 = vld [vmem:[%s282 + $0x2c0] sm:$0xff]
        %v470 = vld [vmem:[%s282 + $0x2c8] sm:$0xff]
        %v471 = vld [vmem:[%s282 + $0x2d0] sm:$0xff]
        %v472 = vld [vmem:[%s282 + $0x2d8] sm:$0xff]
        %v473 = vld [vmem:[%s282 + $0x2e0] sm:$0xff]
        %v474 = vld [vmem:[%s282 + $0x2e8] sm:$0xff]
        %v475 = vld [vmem:[%s282 + $0x2f0] sm:$0xff]
        %v476 = vld [vmem:[%s282 + $0x2f8] sm:$0xff]
        %v477 = vld [vmem:[%s282 + $0x300] sm:$0xff]
        %v478 = vld [vmem:[%s282 + $0x308] sm:$0xff]
        %v479 = vld [vmem:[%s282 + $0x310] sm:$0xff]
        %v480 = vld [vmem:[%s282 + $0x318] sm:$0xff]
        %v481 = vld [vmem:[%s282 + $0x320] sm:$0xff]
        %v482 = vld [vmem:[%s282 + $0x328] sm:$0xff]
        %v483 = vld [vmem:[%s282 + $0x330] sm:$0xff]
        %v484 = vld [vmem:[%s282 + $0x338] sm:$0xff]
        %v485 = vld [vmem:[%s282 + $0x340] sm:$0xff]
        %v486 = vld [vmem:[%s282 + $0x348] sm:$0xff]
        %v487 = vld [vmem:[%s282 + $0x350] sm:$0xff]
        %v488 = vld [vmem:[%s282 + $0x358] sm:$0xff]
        %v489 = vld [vmem:[%s282 + $0x360] sm:$0xff]
        %v490 = vld [vmem:[%s282 + $0x368] sm:$0xff]
        %v491 = vld [vmem:[%s282 + $0x370] sm:$0xff]
        %v492 = vld [vmem:[%s282 + $0x378] sm:$0xff]
        %v493 = vld [vmem:[%s282 + $0x380] sm:$0xff]
        %v494 = vld [vmem:[%s282 + $0x388] sm:$0xff]
        %v495 = vld [vmem:[%s282 + $0x390] sm:$0xff]
        %v496 = vld [vmem:[%s282 + $0x398] sm:$0xff]
        %v497 = vld [vmem:[%s282 + $0x3a0] sm:$0xff]
        %v498 = vld [vmem:[%s282 + $0x3a8] sm:$0xff]
        %v499 = vld [vmem:[%s282 + $0x3b0] sm:$0xff]
        %v500 = vld [vmem:[%s282 + $0x3b8] sm:$0xff]
        %v501 = vld [vmem:[%s282 + $0x3c0] sm:$0xff]
        %v502 = vld [vmem:[%s282 + $0x3c8] sm:$0xff]
        %v503 = vld [vmem:[%s282 + $0x3d0] sm:$0xff]
        %v504 = vld [vmem:[%s282 + $0x3d8] sm:$0xff]
        %v505 = vld [vmem:[%s282 + $0x3e0] sm:$0xff]
        %v506 = vld [vmem:[%s282 + $0x3e8] sm:$0xff]
        %v507 = vld [vmem:[%s282 + $0x3f0] sm:$0xff]
        %v508 = vld [vmem:[%s282 + $0x3f8] sm:$0xff]
        %v509 = vld [vmem:[%s282 + $0x400] sm:$0xff]
        %v510 = vld [vmem:[%s282 + $0x408] sm:$0xff]
        %v511 = vld [vmem:[%s282 + $0x410] sm:$0xff]
        %v512 = vld [vmem:[%s282 + $0x418] sm:$0xff]
        %v513 = vld [vmem:[%s282 + $0x420] sm:$0xff]
        %v514 = vld [vmem:[%s282 + $0x428] sm:$0xff]
        %v515 = vld [vmem:[%s282 + $0x430] sm:$0xff]
        %v516 = vld [vmem:[%s282 + $0x438] sm:$0xff]
        %v517 = vld [vmem:[%s282 + $0x440] sm:$0xff]
        %v518 = vld [vmem:[%s282 + $0x448] sm:$0xff]
        %v519 = vld [vmem:[%s282 + $0x450] sm:$0xff]
        %v520 = vld [vmem:[%s282 + $0x458] sm:$0xff]
        %v521 = vld [vmem:[%s282 + $0x460] sm:$0xff]
        %v522 = vld [vmem:[%s282 + $0x468] sm:$0xff]
        %v523 = vld [vmem:[%s282 + $0x470] sm:$0xff]
        %v524 = vld [vmem:[%s282 + $0x478] sm:$0xff]
        %vm525 = vcmask 523264
        %v527 = vsel %vm525, %v345, 0
        %v530 = vsel %vm525, %v350, 0
        %v533 = vsel %vm525, %v355, 0
        %v536 = vsel %vm525, %v360, 0
        %v539 = vsel %vm525, %v365, 0
        %v542 = vsel %vm525, %v370, 0
        %v545 = vsel %vm525, %v375, 0
        %v548 = vsel %vm525, %v380, 0
        %550 = vmatprep.subr.mxu0 %v382
        %551 = vmatpush1.msra.mxu0 %v381
        %552 = vmatprep.subr.mxu0 %v384
        %553 = vmatpush1.msra.mxu0 %v383
        %554 = vmatprep.subr.mxu0 %v386
        %555 = vmatpush1.msra.mxu0 %v385
        %556 = vmatprep.subr.mxu0 %v388
        %557 = vmatpush1.msra.mxu0 %v387
        %558 = vmatprep.subr.mxu0 %v390
        %559 = vmatpush1.msra.mxu0 %v389
        %560 = vmatprep.subr.mxu0 %v392
        %561 = vmatpush1.msra.mxu0 %v391
        %562 = vmatprep.subr.mxu0 %v394
        %563 = vmatpush1.msra.mxu0 %v393
        %564 = vmatprep.subr.mxu0 %v396
        %565 = vmatpush1.msra.mxu0 %v395
        %566 = vmatprep.subr.mxu0 %v398
        %567 = vmatpush1.msra.mxu0 %v397
        %568 = vmatprep.subr.mxu0 %v400
        %569 = vmatpush1.msra.mxu0 %v399
        %570 = vmatprep.subr.mxu0 %v402
        %571 = vmatpush1.msra.mxu0 %v401
        %572 = vmatprep.subr.mxu0 %v404
        %573 = vmatpush1.msra.mxu0 %v403
        %574 = vmatprep.subr.mxu0 %v406
        %575 = vmatpush1.msra.mxu0 %v405
        %576 = vmatprep.subr.mxu0 %v408
        %577 = vmatpush1.msra.mxu0 %v407
        %578 = vmatprep.subr.mxu0 %v410
        %579 = vmatpush1.msra.mxu0 %v409
        %580 = vmatprep.subr.mxu0 %v412
        %581 = vmatpush1.msra.mxu0 %v411
        %582 = vmatprep.subr.mxu0 %v414
        %583 = vmatpush1.msra.mxu0 %v413
        %584 = vmatprep.subr.mxu0 %v416
        %585 = vmatpush1.msra.mxu0 %v415
        %586 = vmatprep.subr.mxu0 %v418
        %587 = vmatpush1.msra.mxu0 %v417
        %588 = vmatprep.subr.mxu0 %v420
        %589 = vmatpush1.msra.mxu0 %v419
        %590 = vmatprep.subr.mxu0 %v422
        %591 = vmatpush1.msra.mxu0 %v421
        %592 = vmatprep.subr.mxu0 %v424
        %593 = vmatpush1.msra.mxu0 %v423
        %594 = vmatprep.subr.mxu0 %v426
        %595 = vmatpush1.msra.mxu0 %v425
        %596 = vmatprep.subr.mxu0 %v428
        %597 = vmatpush1.msra.mxu0 %v427
        %598 = vmatprep.subr.mxu0 %v430
        %599 = vmatpush1.msra.mxu0 %v429
        %600 = vmatprep.subr.mxu0 %v432
        %601 = vmatpush1.msra.mxu0 %v431
        %602 = vmatprep.subr.mxu0 %v434
        %603 = vmatpush1.msra.mxu0 %v433
        %604 = vmatprep.subr.mxu0 %v436
        %605 = vmatpush1.msra.mxu0 %v435
        %606 = vmatprep.subr.mxu0 %v438
        %607 = vmatpush1.msra.mxu0 %v437
        %608 = vmatprep.subr.mxu0 %v440
        %609 = vmatpush1.msra.mxu0 %v439
        %610 = vmatprep.subr.mxu0 %v442
        %611 = vmatpush1.msra.mxu0 %v441
        %612 = vmatprep.subr.mxu0 %v444
        %613 = vmatpush1.msra.mxu0 %v443
        %614 = vmatprep.mubr.f32.mxu0 %v342
        %615 = vmatmul.mubr.f32.gmra.mrb[0].mxu0 %v341
        %v616 = vpop.f32.mrb[0].mxu0
        %v617 = vadd.f32 0.0, %v616
        %v618 = vpop.f32.mrb[0].mxu0
        %v619 = vadd.f32 0.0, %v618
        %620 = vmatprep.mubr.f32.mxu0 %v347
        %621 = vmatmul.mubr.f32.gmra.mrb[0].mxu0 %v346
        %v622 = vpop.f32.mrb[0].mxu0
        %v623 = vadd.f32 0.0, %v622
        %v624 = vpop.f32.mrb[0].mxu0
        %v625 = vadd.f32 0.0, %v624
        %626 = vmatprep.mubr.f32.mxu0 %v352
        %627 = vmatmul.mubr.f32.gmra.mrb[0].mxu0 %v351
        %v628 = vpop.f32.mrb[0].mxu0
        %v629 = vadd.f32 0.0, %v628
        %v630 = vpop.f32.mrb[0].mxu0
        %v631 = vadd.f32 0.0, %v630
        %632 = vmatprep.mubr.f32.mxu0 %v357
        %633 = vmatmul.mubr.f32.gmra.mrb[0].mxu0 %v356
        %v634 = vpop.f32.mrb[0].mxu0
        %v635 = vadd.f32 0.0, %v634
        %v636 = vpop.f32.mrb[0].mxu0
        %v637 = vadd.f32 0.0, %v636
        %638 = vmatprep.mubr.f32.mxu0 %v362
        %639 = vmatmul.mubr.f32.gmra.mrb[0].mxu0 %v361
        %v640 = vpop.f32.mrb[0].mxu0
        %v641 = vadd.f32 0.0, %v640
        %v642 = vpop.f32.mrb[0].mxu0
        %v643 = vadd.f32 0.0, %v642
        %644 = vmatprep.mubr.f32.mxu0 %v367
        %645 = vmatmul.mubr.f32.gmra.mrb[0].mxu0 %v366
        %v646 = vpop.f32.mrb[0].mxu0
        %v647 = vadd.f32 0.0, %v646
        %v648 = vpop.f32.mrb[0].mxu0
        %v649 = vadd.f32 0.0, %v648
        %650 = vmatprep.mubr.f32.mxu0 %v372
        %651 = vmatmul.mubr.f32.gmra.mrb[0].mxu0 %v371
        %v652 = vpop.f32.mrb[0].mxu0
        %v653 = vadd.f32 0.0, %v652
        %v654 = vpop.f32.mrb[0].mxu0
        %v655 = vadd.f32 0.0, %v654
        %656 = vmatprep.mubr.f32.mxu0 %v377
        %657 = vmatmul.mubr.f32.gmra.mrb[0].mxu0 %v376
        %v658 = vpop.f32.mrb[0].mxu0
        %v659 = vadd.f32 0.0, %v658
        %v660 = vpop.f32.mrb[0].mxu0
        %v661 = vadd.f32 0.0, %v660
        %662 = vdwg.mxu0
        %663 = vmatprep.subr.mxu0 %v446
        %664 = vmatpush1.msra.mxu0 %v445
        %665 = vmatprep.subr.mxu0 %v448
        %666 = vmatpush1.msra.mxu0 %v447
        %667 = vmatprep.subr.mxu0 %v450
        %668 = vmatpush1.msra.mxu0 %v449
        %669 = vmatprep.subr.mxu0 %v452
        %670 = vmatpush1.msra.mxu0 %v451
        %671 = vmatprep.subr.mxu0 %v454
        %672 = vmatpush1.msra.mxu0 %v453
        %673 = vmatprep.subr.mxu0 %v456
        %674 = vmatpush1.msra.mxu0 %v455
        %675 = vmatprep.subr.mxu0 %v458
        %676 = vmatpush1.msra.mxu0 %v457
        %677 = vmatprep.subr.mxu0 %v460
        %678 = vmatpush1.msra.mxu0 %v459
        %679 = vmatprep.subr.mxu0 %v462
        %680 = vmatpush1.msra.mxu0 %v461
        %681 = vmatprep.subr.mxu0 %v464
        %682 = vmatpush1.msra.mxu0 %v463
        %683 = vmatprep.subr.mxu0 %v466
        %684 = vmatpush1.msra.mxu0 %v465
        %685 = vmatprep.subr.mxu0 %v468
        %686 = vmatpush1.msra.mxu0 %v467
        %687 = vmatprep.subr.mxu0 %v470
        %688 = vmatpush1.msra.mxu0 %v469
        %689 = vmatprep.subr.mxu0 %v472
        %690 = vmatpush1.msra.mxu0 %v471
        %691 = vmatprep.subr.mxu0 %v474
        %692 = vmatpush1.msra.mxu0 %v473
        %693 = vmatprep.subr.mxu0 %v476
        %694 = vmatpush1.msra.mxu0 %v475
        %695 = vmatprep.subr.mxu0 %v478
        %696 = vmatpush1.msra.mxu0 %v477
        %697 = vmatprep.subr.mxu0 %v480
        %698 = vmatpush1.msra.mxu0 %v479
        %699 = vmatprep.subr.mxu0 %v482
        %700 = vmatpush1.msra.mxu0 %v481
        %701 = vmatprep.subr.mxu0 %v484
        %702 = vmatpush1.msra.mxu0 %v483
        %703 = vmatprep.subr.mxu0 %v486
        %704 = vmatpush1.msra.mxu0 %v485
        %705 = vmatprep.subr.mxu0 %v488
        %706 = vmatpush1.msra.mxu0 %v487
        %707 = vmatprep.subr.mxu0 %v490
        %708 = vmatpush1.msra.mxu0 %v489
        %709 = vmatprep.subr.mxu0 %v492
        %710 = vmatpush1.msra.mxu0 %v491
        %711 = vmatprep.subr.mxu0 %v494
        %712 = vmatpush1.msra.mxu0 %v493
        %713 = vmatprep.subr.mxu0 %v496
        %714 = vmatpush1.msra.mxu0 %v495
        %715 = vmatprep.subr.mxu0 %v498
        %716 = vmatpush1.msra.mxu0 %v497
        %717 = vmatprep.subr.mxu0 %v500
        %718 = vmatpush1.msra.mxu0 %v499
        %719 = vmatprep.subr.mxu0 %v502
        %720 = vmatpush1.msra.mxu0 %v501
        %721 = vmatprep.subr.mxu0 %v504
        %722 = vmatpush1.msra.mxu0 %v503
        %723 = vmatprep.subr.mxu0 %v506
        %724 = vmatpush1.msra.mxu0 %v505
        %725 = vmatprep.subr.mxu0 %v508
        %726 = vmatpush1.msra.mxu0 %v507
        %727 = vmatprep.mubr.f32.mxu0 %v344
        %728 = vmatmul.mubr.f32.gmra.mrb[0].mxu0 %v343
        %v729 = vpop.f32.mrb[0].mxu0
        %v730 = vadd.f32 %v617, %v729
        %v731 = vpop.f32.mrb[0].mxu0
        %v732 = vadd.f32 %v619, %v731
        %733 = vmatprep.mubr.f32.mxu0 %v349
        %734 = vmatmul.mubr.f32.gmra.mrb[0].mxu0 %v348
        %v735 = vpop.f32.mrb[0].mxu0
        %v736 = vadd.f32 %v623, %v735
        %v737 = vpop.f32.mrb[0].mxu0
        %v738 = vadd.f32 %v625, %v737
        %739 = vmatprep.mubr.f32.mxu0 %v354
        %740 = vmatmul.mubr.f32.gmra.mrb[0].mxu0 %v353
        %v741 = vpop.f32.mrb[0].mxu0
        %v742 = vadd.f32 %v629, %v741
        %v743 = vpop.f32.mrb[0].mxu0
        %v744 = vadd.f32 %v631, %v743
        %745 = vmatprep.mubr.f32.mxu0 %v359
        %746 = vmatmul.mubr.f32.gmra.mrb[0].mxu0 %v358
        %v747 = vpop.f32.mrb[0].mxu0
        %v748 = vadd.f32 %v635, %v747
        %v749 = vpop.f32.mrb[0].mxu0
        %v750 = vadd.f32 %v637, %v749
        %751 = vmatprep.mubr.f32.mxu0 %v364
        %752 = vmatmul.mubr.f32.gmra.mrb[0].mxu0 %v363
        %v753 = vpop.f32.mrb[0].mxu0
        %v754 = vadd.f32 %v641, %v753
        %v755 = vpop.f32.mrb[0].mxu0
        %v756 = vadd.f32 %v643, %v755
        %757 = vmatprep.mubr.f32.mxu0 %v369
        %758 = vmatmul.mubr.f32.gmra.mrb[0].mxu0 %v368
        %v759 = vpop.f32.mrb[0].mxu0
        %v760 = vadd.f32 %v647, %v759
        %v761 = vpop.f32.mrb[0].mxu0
        %v762 = vadd.f32 %v649, %v761
        %763 = vmatprep.mubr.f32.mxu0 %v374
        %764 = vmatmul.mubr.f32.gmra.mrb[0].mxu0 %v373
        %v765 = vpop.f32.mrb[0].mxu0
        %v766 = vadd.f32 %v653, %v765
        %v767 = vpop.f32.mrb[0].mxu0
        %v768 = vadd.f32 %v655, %v767
        %769 = vmatprep.mubr.f32.mxu0 %v379
        %770 = vmatmul.mubr.f32.gmra.mrb[0].mxu0 %v378
        %v771 = vpop.f32.mrb[0].mxu0
        %v772 = vadd.f32 %v659, %v771
        %v773 = vpop.f32.mrb[0].mxu0
        %v774 = vadd.f32 %v661, %v773
        %775 = vdwg.mxu0
        %776 = vmatprep.subr.mxu0 %v510
        %777 = vmatpush1.msra.mxu0 %v509
        %778 = vmatprep.subr.mxu0 %v512
        %779 = vmatpush1.msra.mxu0 %v511
        %780 = vmatprep.subr.mxu0 %v514
        %781 = vmatpush1.msra.mxu0 %v513
        %782 = vmatprep.subr.mxu0 %v516
        %783 = vmatpush1.msra.mxu0 %v515
        %784 = vmatprep.subr.mxu0 %v518
        %785 = vmatpush1.msra.mxu0 %v517
        %786 = vmatprep.subr.mxu0 %v520
        %787 = vmatpush1.msra.mxu0 %v519
        %788 = vmatprep.subr.mxu0 %v522
        %789 = vmatpush1.msra.mxu0 %v521
        %790 = vmatprep.subr.mxu0 %v524
        %791 = vmatpush1.msra.mxu0 %v523
        %792 = vmatprep.subr.mxu0 0.0
        %793 = vmatpush1.msra.mxu0 0.0
        %794 = vmatprep.subr.mxu0 0.0
        %795 = vmatpush1.msra.mxu0 0.0
        %796 = vmatprep.subr.mxu0 0.0
        %797 = vmatpush1.msra.mxu0 0.0
        %798 = vmatprep.subr.mxu0 0.0
        %799 = vmatpush1.msra.mxu0 0.0
        %800 = vmatprep.subr.mxu0 0.0
        %801 = vmatpush1.msra.mxu0 0.0
        %802 = vmatprep.subr.mxu0 0.0
        %803 = vmatpush1.msra.mxu0 0.0
        %804 = vmatprep.subr.mxu0 0.0
        %805 = vmatpush1.msra.mxu0 0.0
        %806 = vmatprep.subr.mxu0 0.0
        %807 = vmatpush1.msra.mxu0 0.0
        %808 = vmatprep.subr.mxu0 0.0
        %809 = vmatpush1.msra.mxu0 0.0
        %810 = vmatprep.subr.mxu0 0.0
        %811 = vmatpush1.msra.mxu0 0.0
        %812 = vmatprep.subr.mxu0 0.0
        %813 = vmatpush1.msra.mxu0 0.0
        %814 = vmatprep.subr.mxu0 0.0
        %815 = vmatpush1.msra.mxu0 0.0
        %816 = vmatprep.subr.mxu0 0.0
        %817 = vmatpush1.msra.mxu0 0.0
        %818 = vmatprep.subr.mxu0 0.0
        %819 = vmatpush1.msra.mxu0 0.0
        %820 = vmatprep.subr.mxu0 0.0
        %821 = vmatpush1.msra.mxu0 0.0
        %822 = vmatprep.subr.mxu0 0.0
        %823 = vmatpush1.msra.mxu0 0.0
        %824 = vmatprep.subr.mxu0 0.0
        %825 = vmatpush1.msra.mxu0 0.0
        %826 = vmatprep.subr.mxu0 0.0
        %827 = vmatpush1.msra.mxu0 0.0
        %828 = vmatprep.subr.mxu0 0.0
        %829 = vmatpush1.msra.mxu0 0.0
        %830 = vmatprep.subr.mxu0 0.0
        %831 = vmatpush1.msra.mxu0 0.0
        %832 = vmatprep.subr.mxu0 0.0
        %833 = vmatpush1.msra.mxu0 0.0
        %834 = vmatprep.subr.mxu0 0.0
        %835 = vmatpush1.msra.mxu0 0.0
        %836 = vmatprep.subr.mxu0 0.0
        %837 = vmatpush1.msra.mxu0 0.0
        %838 = vmatprep.subr.mxu0 0.0
        %839 = vmatpush1.msra.mxu0 0.0
        %840 = vmatprep.mubr.f32.mxu0 0.0
        %841 = vmatmul.mubr.f32.gmra.mrb[0].mxu0 %v527
        %v842 = vpop.f32.mrb[0].mxu0
        %v843 = vadd.f32 %v730, %v842
        %v844 = vpop.f32.mrb[0].mxu0
        %v845 = vadd.f32 %v732, %v844
        %846 = vmatprep.mubr.f32.mxu0 0.0
        %847 = vmatmul.mubr.f32.gmra.mrb[0].mxu0 %v530
        %v848 = vpop.f32.mrb[0].mxu0
        %v849 = vadd.f32 %v736, %v848
        %v850 = vpop.f32.mrb[0].mxu0
        %v851 = vadd.f32 %v738, %v850
        %852 = vmatprep.mubr.f32.mxu0 0.0
        %853 = vmatmul.mubr.f32.gmra.mrb[0].mxu0 %v533
        %v854 = vpop.f32.mrb[0].mxu0
        %v855 = vadd.f32 %v742, %v854
        %v856 = vpop.f32.mrb[0].mxu0
        %v857 = vadd.f32 %v744, %v856
        %858 = vmatprep.mubr.f32.mxu0 0.0
        %859 = vmatmul.mubr.f32.gmra.mrb[0].mxu0 %v536
        %v860 = vpop.f32.mrb[0].mxu0
        %v861 = vadd.f32 %v748, %v860
        %v862 = vpop.f32.mrb[0].mxu0
        %v863 = vadd.f32 %v750, %v862
        %864 = vmatprep.mubr.f32.mxu0 0.0
        %865 = vmatmul.mubr.f32.gmra.mrb[0].mxu0 %v539
        %v866 = vpop.f32.mrb[0].mxu0
        %v867 = vadd.f32 %v754, %v866
        %v868 = vpop.f32.mrb[0].mxu0
        %v869 = vadd.f32 %v756, %v868
        %870 = vmatprep.mubr.f32.mxu0 0.0
        %871 = vmatmul.mubr.f32.gmra.mrb[0].mxu0 %v542
        %v872 = vpop.f32.mrb[0].mxu0
        %v873 = vadd.f32 %v760, %v872
        %v874 = vpop.f32.mrb[0].mxu0
        %v875 = vadd.f32 %v762, %v874
        %876 = vmatprep.mubr.f32.mxu0 0.0
        %877 = vmatmul.mubr.f32.gmra.mrb[0].mxu0 %v545
        %v878 = vpop.f32.mrb[0].mxu0
        %v879 = vadd.f32 %v766, %v878
        %v880 = vpop.f32.mrb[0].mxu0
        %v881 = vadd.f32 %v768, %v880
        %882 = vmatprep.mubr.f32.mxu0 0.0
        %883 = vmatmul.mubr.f32.gmra.mrb[0].mxu0 %v548
        %v884 = vpop.f32.mrb[0].mxu0
        %v885 = vadd.f32 %v772, %v884
        %v886 = vpop.f32.mrb[0].mxu0
        %v887 = vadd.f32 %v774, %v886
        %888 = vdwg.mxu0
        %v889 = vadd.f32 %v843, %v845
        %890 = vadd.xlane.f32.xlu0 %v889
        %v891 = vpop.xlane.xlu0 %890
        %v892 = vadd.f32 %v849, %v851
        %893 = vadd.xlane.f32.xlu0 %v892
        %v894 = vpop.xlane.xlu0 %893
        %v895 = vadd.f32 %v855, %v857
        %896 = vadd.xlane.f32.xlu0 %v895
        %v897 = vpop.xlane.xlu0 %896
        %v898 = vadd.f32 %v861, %v863
        %899 = vadd.xlane.f32.xlu0 %v898
        %v900 = vpop.xlane.xlu0 %899
        %v901 = vadd.f32 %v867, %v869
        %902 = vadd.xlane.f32.xlu0 %v901
        %v903 = vpop.xlane.xlu0 %902
        %v904 = vadd.f32 %v873, %v875
        %905 = vadd.xlane.f32.xlu0 %v904
        %v906 = vpop.xlane.xlu0 %905
        %v907 = vadd.f32 %v879, %v881
        %908 = vadd.xlane.f32.xlu0 %v907
        %v909 = vpop.xlane.xlu0 %908
        %v910 = vadd.f32 %v885, %v887
        %911 = vadd.xlane.f32.xlu0 %v910
        %v912 = vpop.xlane.xlu0 %911
        %v913 = vmul.f32 %v843, %v843
        %v914 = vmul.f32 %v845, %v845
        %v915 = vmul.f32 %v849, %v849
        %v916 = vmul.f32 %v851, %v851
        %v917 = vmul.f32 %v855, %v855
        %v918 = vmul.f32 %v857, %v857
        %v919 = vmul.f32 %v861, %v861
        %v920 = vmul.f32 %v863, %v863
        %v921 = vmul.f32 %v867, %v867
        %v922 = vmul.f32 %v869, %v869
        %v923 = vmul.f32 %v873, %v873
        %v924 = vmul.f32 %v875, %v875
        %v925 = vmul.f32 %v879, %v879
        %v926 = vmul.f32 %v881, %v881
        %v927 = vmul.f32 %v885, %v885
        %v928 = vmul.f32 %v887, %v887
        %v929 = vadd.f32 %v913, %v914
        %930 = vadd.xlane.f32.xlu0 %v929
        %v931 = vpop.xlane.xlu0 %930
        %v932 = vadd.f32 %v915, %v916
        %933 = vadd.xlane.f32.xlu0 %v932
        %v934 = vpop.xlane.xlu0 %933
        %v935 = vadd.f32 %v917, %v918
        %936 = vadd.xlane.f32.xlu0 %v935
        %v937 = vpop.xlane.xlu0 %936
        %v938 = vadd.f32 %v919, %v920
        %939 = vadd.xlane.f32.xlu0 %v938
        %v940 = vpop.xlane.xlu0 %939
        %v941 = vadd.f32 %v921, %v922
        %942 = vadd.xlane.f32.xlu0 %v941
        %v943 = vpop.xlane.xlu0 %942
        %v944 = vadd.f32 %v923, %v924
        %945 = vadd.xlane.f32.xlu0 %v944
        %v946 = vpop.xlane.xlu0 %945
        %v947 = vadd.f32 %v925, %v926
        %948 = vadd.xlane.f32.xlu0 %v947
        %v949 = vpop.xlane.xlu0 %948
        %v950 = vadd.f32 %v927, %v928
        %951 = vadd.xlane.f32.xlu0 %v950
        %v952 = vpop.xlane.xlu0 %951
        %vm953 = vcmask 7168
        %v954 = vsel %vm953, %v891, %v931
        %v955 = vsel %vm953, %v894, %v934
        %v956 = vsel %vm953, %v897, %v937
        %v957 = vsel %vm953, %v900, %v940
        %v958 = vsel %vm953, %v903, %v943
        %v959 = vsel %vm953, %v906, %v946
        %v960 = vsel %vm953, %v909, %v949
        %v961 = vsel %vm953, %v912, %v952
        %v962 = vld [vmem:[#allocation7] sm:$0xff]
        %v963 = vld [vmem:[#allocation7 + $0x8] sm:$0xff]
        %v964 = vld [vmem:[#allocation7 + $0x10] sm:$0xff]
        %v965 = vld [vmem:[#allocation7 + $0x18] sm:$0xff]
        %v966 = vld [vmem:[#allocation7 + $0x20] sm:$0xff]
        %v967 = vld [vmem:[#allocation7 + $0x28] sm:$0xff]
        %v968 = vld [vmem:[#allocation7 + $0x30] sm:$0xff]
        %v969 = vld [vmem:[#allocation7 + $0x38] sm:$0xff]
        %v971 = vsel %vm525, %v962, 0
        %v974 = vsel %vm525, %v963, 0
        %v977 = vsel %vm525, %v964, 0
        %v980 = vsel %vm525, %v965, 0
        %v983 = vsel %vm525, %v966, 0
        %v986 = vsel %vm525, %v967, 0
        %v989 = vsel %vm525, %v968, 0
        %v992 = vsel %vm525, %v969, 0
        %994 = vmatprep.subr.mxu0 0.0
        %995 = vmatpush1.msra.mxu0 %v954
        %996 = vmatprep.subr.mxu0 0.0
        %997 = vmatpush1.msra.mxu0 %v955
        %998 = vmatprep.subr.mxu0 0.0
        %999 = vmatpush1.msra.mxu0 %v956
        %1000 = vmatprep.subr.mxu0 0.0
        %1001 = vmatpush1.msra.mxu0 %v957
        %1002 = vmatprep.subr.mxu0 0.0
        %1003 = vmatpush1.msra.mxu0 %v958
        %1004 = vmatprep.subr.mxu0 0.0
        %1005 = vmatpush1.msra.mxu0 %v959
        %1006 = vmatprep.subr.mxu0 0.0
        %1007 = vmatpush1.msra.mxu0 %v960
        %1008 = vmatprep.subr.mxu0 0.0
        %1009 = vmatpush1.msra.mxu0 %v961
        %1010 = vmatprep.subr.mxu0 0.0
        %1011 = vmatpush1.msra.mxu0 0.0
        %1012 = vmatprep.subr.mxu0 0.0
        %1013 = vmatpush1.msra.mxu0 0.0
        %1014 = vmatprep.subr.mxu0 0.0
        %1015 = vmatpush1.msra.mxu0 0.0
        %1016 = vmatprep.subr.mxu0 0.0
        %1017 = vmatpush1.msra.mxu0 0.0
        %1018 = vmatprep.subr.mxu0 0.0
        %1019 = vmatpush1.msra.mxu0 0.0
        %1020 = vmatprep.subr.mxu0 0.0
        %1021 = vmatpush1.msra.mxu0 0.0
        %1022 = vmatprep.subr.mxu0 0.0
        %1023 = vmatpush1.msra.mxu0 0.0
        %1024 = vmatprep.subr.mxu0 0.0
        %1025 = vmatpush1.msra.mxu0 0.0
        %1026 = vmatprep.subr.mxu0 0.0
        %1027 = vmatpush1.msra.mxu0 0.0
        %1028 = vmatprep.subr.mxu0 0.0
        %1029 = vmatpush1.msra.mxu0 0.0
        %1030 = vmatprep.subr.mxu0 0.0
        %1031 = vmatpush1.msra.mxu0 0.0
        %1032 = vmatprep.subr.mxu0 0.0
        %1033 = vmatpush1.msra.mxu0 0.0
        %1034 = vmatprep.subr.mxu0 0.0
        %1035 = vmatpush1.msra.mxu0 0.0
        %1036 = vmatprep.subr.mxu0 0.0
        %1037 = vmatpush1.msra.mxu0 0.0
        %1038 = vmatprep.subr.mxu0 0.0
        %1039 = vmatpush1.msra.mxu0 0.0
        %1040 = vmatprep.subr.mxu0 0.0
        %1041 = vmatpush1.msra.mxu0 0.0
        %1042 = vmatprep.subr.mxu0 0.0
        %1043 = vmatpush1.msra.mxu0 0.0
        %1044 = vmatprep.subr.mxu0 0.0
        %1045 = vmatpush1.msra.mxu0 0.0
        %1046 = vmatprep.subr.mxu0 0.0
        %1047 = vmatpush1.msra.mxu0 0.0
        %1048 = vmatprep.subr.mxu0 0.0
        %1049 = vmatpush1.msra.mxu0 0.0
        %1050 = vmatprep.subr.mxu0 0.0
        %1051 = vmatpush1.msra.mxu0 0.0
        %1052 = vmatprep.subr.mxu0 0.0
        %1053 = vmatpush1.msra.mxu0 0.0
        %1054 = vmatprep.subr.mxu0 0.0
        %1055 = vmatpush1.msra.mxu0 0.0
        %1056 = vmatprep.subr.mxu0 0.0
        %1057 = vmatpush1.msra.mxu0 0.0
        %1058 = vmatprep.mubr.f32.mxu0 0.0
        %1059 = vmatmul.mubr.f32.gmra.mrb[0].mxu0 %v971
        %v1060 = vpop.f32.mrb[0].mxu0
        %v1061 = vadd.f32 0.0, %v1060
        %v1062 = vpop.f32.mrb[0].mxu0
        %1063 = vmatprep.mubr.f32.mxu0 0.0
        %1064 = vmatmul.mubr.f32.gmra.mrb[0].mxu0 %v974
        %v1065 = vpop.f32.mrb[0].mxu0
        %v1066 = vadd.f32 0.0, %v1065
        %v1067 = vpop.f32.mrb[0].mxu0
        %1068 = vmatprep.mubr.f32.mxu0 0.0
        %1069 = vmatmul.mubr.f32.gmra.mrb[0].mxu0 %v977
        %v1070 = vpop.f32.mrb[0].mxu0
        %v1071 = vadd.f32 0.0, %v1070
        %v1072 = vpop.f32.mrb[0].mxu0
        %1073 = vmatprep.mubr.f32.mxu0 0.0
        %1074 = vmatmul.mubr.f32.gmra.mrb[0].mxu0 %v980
        %v1075 = vpop.f32.mrb[0].mxu0
        %v1076 = vadd.f32 0.0, %v1075
        %v1077 = vpop.f32.mrb[0].mxu0
        %1078 = vmatprep.mubr.f32.mxu0 0.0
        %1079 = vmatmul.mubr.f32.gmra.mrb[0].mxu0 %v983
        %v1080 = vpop.f32.mrb[0].mxu0
        %v1081 = vadd.f32 0.0, %v1080
        %v1082 = vpop.f32.mrb[0].mxu0
        %1083 = vmatprep.mubr.f32.mxu0 0.0
        %1084 = vmatmul.mubr.f32.gmra.mrb[0].mxu0 %v986
        %v1085 = vpop.f32.mrb[0].mxu0
        %v1086 = vadd.f32 0.0, %v1085
        %v1087 = vpop.f32.mrb[0].mxu0
        %1088 = vmatprep.mubr.f32.mxu0 0.0
        %1089 = vmatmul.mubr.f32.gmra.mrb[0].mxu0 %v989
        %v1090 = vpop.f32.mrb[0].mxu0
        %v1091 = vadd.f32 0.0, %v1090
        %v1092 = vpop.f32.mrb[0].mxu0
        %1093 = vmatprep.mubr.f32.mxu0 0.0
        %1094 = vmatmul.mubr.f32.gmra.mrb[0].mxu0 %v992
        %v1095 = vpop.f32.mrb[0].mxu0
        %v1096 = vadd.f32 0.0, %v1095
        %v1097 = vpop.f32.mrb[0].mxu0
        %1098 = vdwg.mxu0
        %v1099 = vmul.f32 %v1061, 0.001953125
        %v1100 = vmul.f32 %v1066, 0.001953125
        %v1101 = vmul.f32 %v1071, 0.001953125
        %v1102 = vmul.f32 %v1076, 0.001953125
        %v1103 = vmul.f32 %v1081, 0.001953125
        %v1104 = vmul.f32 %v1086, 0.001953125
        %v1105 = vmul.f32 %v1091, 0.001953125
        %v1106 = vmul.f32 %v1096, 0.001953125
        %v1107 = vmul.f32 %v1099, %v1099
        %v1108 = vmul.f32 %v1100, %v1100
        %v1109 = vmul.f32 %v1101, %v1101
        %v1110 = vmul.f32 %v1102, %v1102
        %v1111 = vmul.f32 %v1103, %v1103
        %v1112 = vmul.f32 %v1104, %v1104
        %v1113 = vmul.f32 %v1105, %v1105
        %v1114 = vmul.f32 %v1106, %v1106
        %1123 = vrot.lane.b32.xlu0 %v1107, 1
        %v1124 = vpop.permute.xlu0 %1123
        %1125 = vrot.lane.b32.xlu0 %v1108, 1
        %v1126 = vpop.permute.xlu0 %1125
        %1127 = vrot.lane.b32.xlu0 %v1109, 1
        %v1128 = vpop.permute.xlu0 %1127
        %1129 = vrot.lane.b32.xlu0 %v1110, 1
        %v1130 = vpop.permute.xlu0 %1129
        %1131 = vrot.lane.b32.xlu0 %v1111, 1
        %v1132 = vpop.permute.xlu0 %1131
        %1133 = vrot.lane.b32.xlu0 %v1112, 1
        %v1134 = vpop.permute.xlu0 %1133
        %1135 = vrot.lane.b32.xlu0 %v1113, 1
        %v1136 = vpop.permute.xlu0 %1135
        %1137 = vrot.lane.b32.xlu0 %v1114, 1
        %v1138 = vpop.permute.xlu0 %1137
        %v1147 = vsub.f32 %v1099, %v1124
        %v1148 = vsub.f32 %v1100, %v1126
        %v1149 = vsub.f32 %v1101, %v1128
        %v1150 = vsub.f32 %v1102, %v1130
        %v1151 = vsub.f32 %v1103, %v1132
        %v1152 = vsub.f32 %v1104, %v1134
        %v1153 = vsub.f32 %v1105, %v1136
        %v1154 = vsub.f32 %v1106, %v1138
        %v1155 = vmax.f32 %v1147, 0.0
        %v1156 = vmax.f32 %v1148, 0.0
        %v1157 = vmax.f32 %v1149, 0.0
        %v1158 = vmax.f32 %v1150, 0.0
        %v1159 = vmax.f32 %v1151, 0.0
        %v1160 = vmax.f32 %v1152, 0.0
        %v1161 = vmax.f32 %v1153, 0.0
        %v1162 = vmax.f32 %v1154, 0.0
        %v1163 = vadd.f32 %v1155, 1e-05
        %v1164 = vadd.f32 %v1156, 1e-05
        %v1165 = vadd.f32 %v1157, 1e-05
        %v1166 = vadd.f32 %v1158, 1e-05
        %v1167 = vadd.f32 %v1159, 1e-05
        %v1168 = vadd.f32 %v1160, 1e-05
        %v1169 = vadd.f32 %v1161, 1e-05
        %v1170 = vadd.f32 %v1162, 1e-05
        %v1171 = vrsqrt.pop %v1163
        %v1172 = vrsqrt.pop %v1164
        %v1173 = vrsqrt.pop %v1165
        %v1174 = vrsqrt.pop %v1166
        %v1175 = vrsqrt.pop %v1167
        %v1176 = vrsqrt.pop %v1168
        %v1177 = vrsqrt.pop %v1169
        %v1178 = vrsqrt.pop %v1170
        %v1179 = vld [vmem:[%s332] sm:$0xff]
        %v1180 = vld [vmem:[%s332 + $0x8] sm:$0xff]
        %v1181 = vld [vmem:[%s332 + $0x10] sm:$0xff]
        %v1182 = vld [vmem:[%s332 + $0x18] sm:$0xff]
        %v1183 = vld [vmem:[%s332 + $0x20] sm:$0xff]
        %v1184 = vld [vmem:[%s332 + $0x28] sm:$0xff]
        %v1185 = vld [vmem:[%s332 + $0x30] sm:$0xff]
        %v1186 = vld [vmem:[%s332 + $0x38] sm:$0xff]
        %1195 = vrot.lane.b32.xlu0 %v1179, 1
        %v1196 = vpop.permute.xlu0 %1195
        %1197 = vrot.lane.b32.xlu0 %v1180, 1
        %v1198 = vpop.permute.xlu0 %1197
        %1199 = vrot.lane.b32.xlu0 %v1181, 1
        %v1200 = vpop.permute.xlu0 %1199
        %1201 = vrot.lane.b32.xlu0 %v1182, 1
        %v1202 = vpop.permute.xlu0 %1201
        %1203 = vrot.lane.b32.xlu0 %v1183, 1
        %v1204 = vpop.permute.xlu0 %1203
        %1205 = vrot.lane.b32.xlu0 %v1184, 1
        %v1206 = vpop.permute.xlu0 %1205
        %1207 = vrot.lane.b32.xlu0 %v1185, 1
        %v1208 = vpop.permute.xlu0 %1207
        %1209 = vrot.lane.b32.xlu0 %v1186, 1
        %v1210 = vpop.permute.xlu0 %1209
        %v1219 = vmul.f32 %v1171, %v1196
        %v1220 = vmul.f32 %v1172, %v1198
        %v1221 = vmul.f32 %v1173, %v1200
        %v1222 = vmul.f32 %v1174, %v1202
        %v1223 = vmul.f32 %v1175, %v1204
        %v1224 = vmul.f32 %v1176, %v1206
        %v1225 = vmul.f32 %v1177, %v1208
        %v1226 = vmul.f32 %v1178, %v1210
        %v1227 = vld [vmem:[%s338] sm:$0xff]
        %v1228 = vld [vmem:[%s338 + $0x8] sm:$0xff]
        %v1229 = vld [vmem:[%s338 + $0x10] sm:$0xff]
        %v1230 = vld [vmem:[%s338 + $0x18] sm:$0xff]
        %v1231 = vld [vmem:[%s338 + $0x20] sm:$0xff]
        %v1232 = vld [vmem:[%s338 + $0x28] sm:$0xff]
        %v1233 = vld [vmem:[%s338 + $0x30] sm:$0xff]
        %v1234 = vld [vmem:[%s338 + $0x38] sm:$0xff]
        %1243 = vrot.lane.b32.xlu0 %v1219, 127
        %v1244 = vpop.permute.xlu0 %1243
        %1245 = vrot.lane.b32.xlu0 %v1220, 127
        %v1246 = vpop.permute.xlu0 %1245
        %1247 = vrot.lane.b32.xlu0 %v1221, 127
        %v1248 = vpop.permute.xlu0 %1247
        %1249 = vrot.lane.b32.xlu0 %v1222, 127
        %v1250 = vpop.permute.xlu0 %1249
        %1251 = vrot.lane.b32.xlu0 %v1223, 127
        %v1252 = vpop.permute.xlu0 %1251
        %1253 = vrot.lane.b32.xlu0 %v1224, 127
        %v1254 = vpop.permute.xlu0 %1253
        %1255 = vrot.lane.b32.xlu0 %v1225, 127
        %v1256 = vpop.permute.xlu0 %1255
        %1257 = vrot.lane.b32.xlu0 %v1226, 127
        %v1258 = vpop.permute.xlu0 %1257
        %v1267 = vmul.f32 %v1099, %v1244
        %v1268 = vmul.f32 %v1100, %v1246
        %v1269 = vmul.f32 %v1101, %v1248
        %v1270 = vmul.f32 %v1102, %v1250
        %v1271 = vmul.f32 %v1103, %v1252
        %v1272 = vmul.f32 %v1104, %v1254
        %v1273 = vmul.f32 %v1105, %v1256
        %v1274 = vmul.f32 %v1106, %v1258
        %v1275 = vsub.f32 %v1227, %v1267
        %v1276 = vsub.f32 %v1228, %v1268
        %v1277 = vsub.f32 %v1229, %v1269
        %v1278 = vsub.f32 %v1230, %v1270
        %v1279 = vsub.f32 %v1231, %v1271
        %v1280 = vsub.f32 %v1232, %v1272
        %v1281 = vsub.f32 %v1233, %v1273
        %v1282 = vsub.f32 %v1234, %v1274
        %1283 = vset.pattern.permute.xlu0 1
        %1284 = vperm.xlu0 %1283, %v1219
        %v1285 = vpop.permute.xlu0 %1284
        %1287 = vset.pattern.permute.xlu0 1
        %1288 = vperm.xlu0 %1287, %v1220
        %v1289 = vpop.permute.xlu0 %1288
        %1291 = vset.pattern.permute.xlu0 1
        %1292 = vperm.xlu0 %1291, %v1221
        %v1293 = vpop.permute.xlu0 %1292
        %1295 = vset.pattern.permute.xlu0 1
        %1296 = vperm.xlu0 %1295, %v1222
        %v1297 = vpop.permute.xlu0 %1296
        %1299 = vset.pattern.permute.xlu0 1
        %1300 = vperm.xlu0 %1299, %v1223
        %v1301 = vpop.permute.xlu0 %1300
        %1303 = vset.pattern.permute.xlu0 1
        %1304 = vperm.xlu0 %1303, %v1224
        %v1305 = vpop.permute.xlu0 %1304
        %1307 = vset.pattern.permute.xlu0 1
        %1308 = vperm.xlu0 %1307, %v1225
        %v1309 = vpop.permute.xlu0 %1308
        %1311 = vset.pattern.permute.xlu0 1
        %1312 = vperm.xlu0 %1311, %v1226
        %v1313 = vpop.permute.xlu0 %1312
        %v1315 = vmul.f32 %v843, %v1285
        %v1316 = vmul.f32 %v845, %v1285
        %v1317 = vmul.f32 %v849, %v1289
        %v1318 = vmul.f32 %v851, %v1289
        %v1319 = vmul.f32 %v855, %v1293
        %v1320 = vmul.f32 %v857, %v1293
        %v1321 = vmul.f32 %v861, %v1297
        %v1322 = vmul.f32 %v863, %v1297
        %v1323 = vmul.f32 %v867, %v1301
        %v1324 = vmul.f32 %v869, %v1301
        %v1325 = vmul.f32 %v873, %v1305
        %v1326 = vmul.f32 %v875, %v1305
        %v1327 = vmul.f32 %v879, %v1309
        %v1328 = vmul.f32 %v881, %v1309
        %v1329 = vmul.f32 %v885, %v1313
        %v1330 = vmul.f32 %v887, %v1313
        %1332 = vset.pattern.permute.xlu0 0
        %1333 = vperm.xlu0 %1332, %v1275
        %v1334 = vpop.permute.xlu0 %1333
        %1337 = vset.pattern.permute.xlu0 0
        %1338 = vperm.xlu0 %1337, %v1276
        %v1339 = vpop.permute.xlu0 %1338
        %1342 = vset.pattern.permute.xlu0 0
        %1343 = vperm.xlu0 %1342, %v1277
        %v1344 = vpop.permute.xlu0 %1343
        %1347 = vset.pattern.permute.xlu0 0
        %1348 = vperm.xlu0 %1347, %v1278
        %v1349 = vpop.permute.xlu0 %1348
        %1352 = vset.pattern.permute.xlu0 0
        %1353 = vperm.xlu0 %1352, %v1279
        %v1354 = vpop.permute.xlu0 %1353
        %1357 = vset.pattern.permute.xlu0 0
        %1358 = vperm.xlu0 %1357, %v1280
        %v1359 = vpop.permute.xlu0 %1358
        %1362 = vset.pattern.permute.xlu0 0
        %1363 = vperm.xlu0 %1362, %v1281
        %v1364 = vpop.permute.xlu0 %1363
        %1367 = vset.pattern.permute.xlu0 0
        %1368 = vperm.xlu0 %1367, %v1282
        %v1369 = vpop.permute.xlu0 %1368
        %v1371 = vadd.f32 %v1315, %v1334
        %v1372 = vadd.f32 %v1316, %v1334
        %v1373 = vadd.f32 %v1317, %v1339
        %v1374 = vadd.f32 %v1318, %v1339
        %v1375 = vadd.f32 %v1319, %v1344
        %v1376 = vadd.f32 %v1320, %v1344
        %v1377 = vadd.f32 %v1321, %v1349
        %v1378 = vadd.f32 %v1322, %v1349
        %v1379 = vadd.f32 %v1323, %v1354
        %v1380 = vadd.f32 %v1324, %v1354
        %v1381 = vadd.f32 %v1325, %v1359
        %v1382 = vadd.f32 %v1326, %v1359
        %v1383 = vadd.f32 %v1327, %v1364
        %v1384 = vadd.f32 %v1328, %v1364
        %v1385 = vadd.f32 %v1329, %v1369
        %v1386 = vadd.f32 %v1330, %v1369
        %vm1387 = vcmp.ge.f32.partialorder %v1371, 0.0
        %vm1388 = vcmp.ge.f32.partialorder %v1372, 0.0
        %vm1389 = vcmp.ge.f32.partialorder %v1373, 0.0
        %vm1390 = vcmp.ge.f32.partialorder %v1374, 0.0
        %vm1391 = vcmp.ge.f32.partialorder %v1375, 0.0
        %vm1392 = vcmp.ge.f32.partialorder %v1376, 0.0
        %vm1393 = vcmp.ge.f32.partialorder %v1377, 0.0
        %vm1394 = vcmp.ge.f32.partialorder %v1378, 0.0
        %vm1395 = vcmp.ge.f32.partialorder %v1379, 0.0
        %vm1396 = vcmp.ge.f32.partialorder %v1380, 0.0
        %vm1397 = vcmp.ge.f32.partialorder %v1381, 0.0
        %vm1398 = vcmp.ge.f32.partialorder %v1382, 0.0
        %vm1399 = vcmp.ge.f32.partialorder %v1383, 0.0
        %vm1400 = vcmp.ge.f32.partialorder %v1384, 0.0
        %vm1401 = vcmp.ge.f32.partialorder %v1385, 0.0
        %vm1402 = vcmp.ge.f32.partialorder %v1386, 0.0
        %v1403 = vmul.f32 %v1371, 0.01
        %v1404 = vmul.f32 %v1372, 0.01
        %v1405 = vmul.f32 %v1373, 0.01
        %v1406 = vmul.f32 %v1374, 0.01
        %v1407 = vmul.f32 %v1375, 0.01
        %v1408 = vmul.f32 %v1376, 0.01
        %v1409 = vmul.f32 %v1377, 0.01
        %v1410 = vmul.f32 %v1378, 0.01
        %v1411 = vmul.f32 %v1379, 0.01
        %v1412 = vmul.f32 %v1380, 0.01
        %v1413 = vmul.f32 %v1381, 0.01
        %v1414 = vmul.f32 %v1382, 0.01
        %v1415 = vmul.f32 %v1383, 0.01
        %v1416 = vmul.f32 %v1384, 0.01
        %v1417 = vmul.f32 %v1385, 0.01
        %v1418 = vmul.f32 %v1386, 0.01
        %v1419 = vsel %vm1387, %v1371, %v1403
        %v1420 = vsel %vm1388, %v1372, %v1404
        %v1421 = vsel %vm1389, %v1373, %v1405
        %v1422 = vsel %vm1390, %v1374, %v1406
        %v1423 = vsel %vm1391, %v1375, %v1407
        %v1424 = vsel %vm1392, %v1376, %v1408
        %v1425 = vsel %vm1393, %v1377, %v1409
        %v1426 = vsel %vm1394, %v1378, %v1410
        %v1427 = vsel %vm1395, %v1379, %v1411
        %v1428 = vsel %vm1396, %v1380, %v1412
        %v1429 = vsel %vm1397, %v1381, %v1413
        %v1430 = vsel %vm1398, %v1382, %v1414
        %v1431 = vsel %vm1399, %v1383, %v1415
        %v1432 = vsel %vm1400, %v1384, %v1416
        %v1433 = vsel %vm1401, %v1385, %v1417
        %v1434 = vsel %vm1402, %v1386, %v1418
        %1435 = vst [vmem:[%s326] sm:$0xff] %v1419
        %1436 = vst [vmem:[%s326 + $0x8] sm:$0xff] %v1420
        %1437 = vst [vmem:[%s326 + $0x10] sm:$0xff] %v1421
        %1438 = vst [vmem:[%s326 + $0x18] sm:$0xff] %v1422
        %1439 = vst [vmem:[%s326 + $0x20] sm:$0xff] %v1423
        %1440 = vst [vmem:[%s326 + $0x28] sm:$0xff] %v1424
        %1441 = vst [vmem:[%s326 + $0x30] sm:$0xff] %v1425
        %1442 = vst [vmem:[%s326 + $0x38] sm:$0xff] %v1426
        %1443 = vst [vmem:[%s326 + $0x40] sm:$0xff] %v1427
        %1444 = vst [vmem:[%s326 + $0x48] sm:$0xff] %v1428
        %1445 = vst [vmem:[%s326 + $0x50] sm:$0xff] %v1429
        %1446 = vst [vmem:[%s326 + $0x58] sm:$0xff] %v1430
        %1447 = vst [vmem:[%s326 + $0x60] sm:$0xff] %v1431
        %1448 = vst [vmem:[%s326 + $0x68] sm:$0xff] %v1432
        %1449 = vst [vmem:[%s326 + $0x70] sm:$0xff] %v1433
        %1450 = vst [vmem:[%s326 + $0x78] sm:$0xff] %v1434
        %s1451 = sand.u32 %s170, 1
        %s1452 = scalar_lea.sflag [#allocation4], %s1451
        %s1453 = sand.u32 %s170, 1
        %s1454 = smul.addr %s1453, 128
        %s1455 = scalar_lea.vmem [#allocation8], %s1454
        // Predicated region
        $region53: #{tpu_custom_call.1} parent=39 // pred_check
          %p1456 = pneg %p180
        $region54: #{tpu_custom_call.1} parent=39 // pred_check_branch
          %1458 = sbr.rel (%p1456) target = $region56
        $region55: #{tpu_custom_call.1} parent=39 // pred_region
          %s1459 = smul.u32 8, %s28
          %s1461 = ssub.s32 2048, 2048
          %1462 = vsyncadd %s1452, %s1461
          %s1463 = smul.addr %s1459, 2
          %s1464 = smul.addr %s27, 16
          %s1465 = sadd.s32 %s1463, %s1464
          %s1466 = smul.addr %s1465, 128
          %s1467 = scalar_lea.hbm %s5, %s1466
          %s1468 = sshll.u32 %s1455, 4
          %s1469 = int_to_ptr.vmem [resolvable:$true] %s1468
          %1474 = dma.vmem_to_hbm [thread:$0]  %s1469, 2048, %s1467, %s1452, 256, 256, 16
        $region56: #{tpu_custom_call.1} parent=39 // pred_fallthru
          _
      $region40: #{tpu_custom_call.1} parent=5 // pred_fallthru
        _
      %p1475 = scmp.le.s32.totalorder 2, %s18
      // Predicated region
      $region57: #{tpu_custom_call.1} parent=5 // pred_check
        %p1476 = pneg %p1475
      $region58: #{tpu_custom_call.1} parent=5 // pred_check_branch
        %1478 = sbr.rel (%p1476) target = $region60
      $region59: #{tpu_custom_call.1} parent=5 // pred_region
        %s1479 = ssub.s32 %s18, 2
        // Predicated region
        $region61: #{tpu_custom_call.1} parent=59 // pred_check
          %p1480 = pneg %p186
        $region62: #{tpu_custom_call.1} parent=59 // pred_check_branch
          %1482 = sbr.rel (%p1480) target = $region64
        $region63: #{tpu_custom_call.1} parent=59 // pred_region
          %s1483 = sand.u32 %s171, 1
          %s1484 = scalar_lea.sflag [#allocation4], %s1483
          %s1485 = sand.u32 %s171, 1
          %s1486 = smul.addr %s1485, 128
          %s1487 = scalar_lea.vmem [#allocation8], %s1486
          %1488 = dma.done %s1484, 2048
        $region64: #{tpu_custom_call.1} parent=59 // pred_fallthru
          _
      $region60: #{tpu_custom_call.1} parent=5 // pred_fallthru
        _
    $region6: #{tpu_custom_call.1} parent=1 // loop_footer
      %s22 = sadd.s32 1, %s18
    $region7: #{tpu_custom_call.1} parent=1 // loop_footer_branch
      %17 = sbr.rel target = $region3
    $region8: #{tpu_custom_call.1} parent=1 // loop_exit
      _
    %1489 = vsyncpa [#allocation3], 1
    %s1490 = scalar_lea.sflag [#allocation3], 1
    %1491 = vsyncpa %s1490, 1
    %1492 = vsyncpa [#allocation6], 1
    %1493 = vsyncpa [#allocation4], 1
    %s1494 = scalar_lea.sflag [#allocation4], 1
    %1495 = vsyncpa %s1494, 1

</llo_original>
